<compile_context>
chip_gen: v5e
topology: v5e:2x2
jax: 0.10.0
libtpu: 0.0.40
codegen_flags: <defaults>
</compile_context>

<pallas_src>
import functools

import jax
import jax.numpy as jnp
import numpy as np
from jax.experimental import pallas as pl
from jax.experimental.pallas import tpu as pltpu

EARTH_RADIUS_KM = 6371.0
_HALF_PI = 1.5707963267948966

# Abramowitz & Stegun 4.4.46:  asin(x) = pi/2 - sqrt(1-x)*(a0 + a1 x + ... + a7 x^7),
# |err| <= 2e-8 on [0, 1].  Coefficients ordered a7 .. a0 for Horner evaluation.
_ASIN_COEFFS = (-0.0012624911, 0.0066700901, -0.0170881256, 0.0308918810,
                -0.0501743046, 0.0889789874, -0.2145988016, 1.5707963050)


def _asin_01(x):
    """arcsin(x) for x in [0, 1] (Mosaic has no asin lowering)."""
    p = jnp.float32(_ASIN_COEFFS[0])
    for coef in _ASIN_COEFFS[1:]:
        p = p * x + jnp.float32(coef)
    return jnp.float32(_HALF_PI) - jnp.sqrt(jnp.maximum(1.0 - x, 0.0)) * p


def _geo_ce_kernel(logits_ref, target_ref, trig_ref, ce_ref, dist_ref, *, n_total):
    """Per-tile partial sums of cross-entropy and haversine distance."""
    i = pl.program_id(0)
    x = logits_ref[...].astype(jnp.float32)                       # (TN, C)
    tn, c = x.shape

    lane = jax.lax.broadcasted_iota(jnp.int32, (tn, c), 1)        # class index per lane
    row = jax.lax.broadcasted_iota(jnp.int32, (tn, 1), 0)
    valid = (i * tn + row) < n_total                              # mask ragged last tile

    tgt = target_ref[...]                                         # (TN, 1) int32
    tgt_mask = lane == tgt                                        # (TN, C) one-hot

    # ---- cross entropy (per-sample), summed over valid rows ----
    m = jnp.max(x, axis=-1, keepdims=True)
    lse = m + jnp.log(jnp.sum(jnp.exp(x - m), axis=-1, keepdims=True))
    picked = jnp.sum(jnp.where(tgt_mask, x, 0.0), axis=-1, keepdims=True)
    per_ce = lse - picked                                         # (TN, 1)
    ce_sum = jnp.sum(jnp.where(valid, per_ce, 0.0))

    # ---- argmax over classes (first max index, like torch.max(input, 1)) ----
    pred = jnp.min(jnp.where(x == m, lane, c), axis=-1, keepdims=True)
    pred_mask = lane == pred

    # ---- one-hot gathers of the geo table on the MXU: (TN, C) @ (C, 8) -> (TN, 8) ----
    g_p = jnp.dot(pred_mask.astype(jnp.float32), trig_ref[...],
                  preferred_element_type=jnp.float32)
    g_t = jnp.dot(tgt_mask.astype(jnp.float32), trig_ref[...],
                  preferred_element_type=jnp.float32)
    shl_p, chl_p, sho_p, cho_p, cl_p = (g_p[:, k:k + 1] for k in range(5))
    shl_t, chl_t, sho_t, cho_t, cl_t = (g_t[:, k:k + 1] for k in range(5))

    # sin((lat_t - lat_p)/2), sin((lon_t - lon_p)/2) via angle-difference identity
    sin_dlat_half = shl_t * chl_p - chl_t * shl_p
    sin_dlon_half = sho_t * cho_p - cho_t * sho_p
    a = sin_dlat_half * sin_dlat_half + cl_p * cl_t * sin_dlon_half * sin_dlon_half
    a = jnp.clip(a, 0.0, 1.0)                                     # fp guard for asin/sqrt
    dist = 2.0 * _asin_01(jnp.sqrt(a)) * EARTH_RADIUS_KM          # (TN, 1) km
    dist_sum = jnp.sum(jnp.where(valid, dist, 0.0))

    # lane-dense (8, 128) partial-sum blocks; wrapper reads [:, 0, 0]
    ce_ref[...] = jnp.broadcast_to(ce_sum, ce_ref.shape)
    dist_ref[...] = jnp.broadcast_to(dist_sum, dist_ref.shape)


def geographical_cross_entropy_loss(logits, target, country_coordinates, *, tile_n=1024):
    """logits: (N, C) any float dtype, target: (N,) int, country_coordinates: (C, 2) deg."""
    n, c = logits.shape
    itemsize = jnp.dtype(logits.dtype).itemsize

    # Tile sizing: keep the double-buffered logits tile well inside scoped VMEM on every
    # generation (v5e default 16 MiB scoped, v7x 64 MiB physical).
    vmem_rows = max(8, ((4 * 1024 * 1024) // (c * itemsize)) // 8 * 8)
    tn = min(tile_n, vmem_rows)
    if tn >= n:
        tn = n                              # single block spanning the full batch
    else:
        tn = max(8, (tn // 8) * 8)          # second-minor block dim must be a multiple of 8
    num_tiles = pl.cdiv(n, tn)

    # Per-class geo table, pre-transposed to (C, 8): [sin(lat/2), cos(lat/2),
    # sin(lon/2), cos(lon/2), cos(lat), 0, 0, 0] in radians.
    lat = jnp.deg2rad(country_coordinates[:, 0].astype(jnp.float32))
    lon = jnp.deg2rad(country_coordinates[:, 1].astype(jnp.float32))
    trig = jnp.stack([jnp.sin(lat / 2), jnp.cos(lat / 2),
                      jnp.sin(lon / 2), jnp.cos(lon / 2), jnp.cos(lat)], axis=1)
    trig = jnp.pad(trig, ((0, 0), (0, 3)))                        # (C, 8)

    target2d = target.astype(jnp.int32).reshape(n, 1)

    cost = pl.CostEstimate(
        flops=int(2 * 2 * n * c * 8 + 12 * n * c),
        transcendentals=int(n * c + 4 * n),
        bytes_accessed=int(n * c * itemsize + n * 4 + c * 8 * 4
                           + 2 * num_tiles * 8 * 128 * 4),
    )

    ce_parts, dist_parts = pl.pallas_call(
        functools.partial(_geo_ce_kernel, n_total=n),
        out_shape=(
            jax.ShapeDtypeStruct((num_tiles, 8, 128), jnp.float32),   # CE partial sums
            jax.ShapeDtypeStruct((num_tiles, 8, 128), jnp.float32),   # distance partial sums
        ),
        grid=(num_tiles,),
        in_specs=[
            pl.BlockSpec((tn, c), lambda i: (i, 0)),     # logits streamed in native dtype
            pl.BlockSpec((tn, 1), lambda i: (i, 0)),     # target
            pl.BlockSpec((c, 8), lambda i: (0, 0)),      # geo table, resident across tiles
        ],
        out_specs=(
            pl.BlockSpec((1, 8, 128), lambda i: (i, 0, 0)),
            pl.BlockSpec((1, 8, 128), lambda i: (i, 0, 0)),
        ),
        compiler_params=pltpu.CompilerParams(
            dimension_semantics=("parallel",),
            vmem_limit_bytes=32 * 1024 * 1024),
        cost_estimate=cost,
    )(logits, target2d, trig)

    ce = jnp.sum(ce_parts[:, 0, 0]) / n                 # global-N mean
    geo = (jnp.sum(dist_parts[:, 0, 0]) / n) / 800.0
    return ce + geo


def _reference(logits, target, coords):
    logits = logits.astype(jnp.float32)
    lse = jax.nn.logsumexp(logits, axis=1)
    ce = jnp.mean(lse - logits[jnp.arange(logits.shape[0]), target])
    pred = jnp.argmax(logits, axis=1)
    lat1, lon1 = coords[pred, 0], coords[pred, 1]
    lat2, lon2 = coords[target, 0], coords[target, 1]
    lat1, lon1, lat2, lon2 = map(jnp.deg2rad, (lat1, lon1, lat2, lon2))
    dlat, dlon = lat2 - lat1, lon2 - lon1
    a = jnp.sin(dlat / 2) ** 2 + jnp.cos(lat1) * jnp.cos(lat2) * jnp.sin(dlon / 2) ** 2
    dist = 2.0 * jnp.arcsin(jnp.sqrt(a)) * EARTH_RADIUS_KM
    return ce + jnp.mean(dist) / 800.0


if __name__ == "__main__":
    N, C = 300, 256   # batch, number of country classes (3 tiles of 128, last one ragged)
    key = jax.random.PRNGKey(0)
    k_logits, k_target, k_lat, k_lon = jax.random.split(key, 4)

    logits = jax.random.normal(k_logits, (N, C), dtype=jnp.float32)
    target = jax.random.randint(k_target, (N,), 0, C, dtype=jnp.int32)
    # synthetic deterministic country_cord table: (lat_deg, lon_deg) per class
    lats = jax.random.uniform(k_lat, (C,), minval=-90.0, maxval=90.0)
    lons = jax.random.uniform(k_lon, (C,), minval=-180.0, maxval=180.0)
    country_coordinates = jnp.stack([lats, lons], axis=1).astype(jnp.float32)

    total = geographical_cross_entropy_loss(
        logits, target, country_coordinates, tile_n=128)
    total = jax.block_until_ready(total)

    ref = jax.block_until_ready(_reference(logits, target, country_coordinates))
    np.testing.assert_allclose(np.asarray(total), np.asarray(ref), rtol=1e-4, atol=1e-3)

    print("KERNEL_OK")
</pallas_src>

<mosaic_0001>
module attributes {stable_mosaic.version = 11 : i64} {
  func.func @_geo_ce_kernel(%arg0: i32, %arg1: memref<128x256xf32, #tpu.memory_space<vmem>>, %arg2: memref<128x1xi32, #tpu.memory_space<vmem>>, %arg3: memref<256x8xf32, #tpu.memory_space<vmem>>, %arg4: memref<1x8x128xf32, #tpu.memory_space<vmem>>, %arg5: memref<1x8x128xf32, #tpu.memory_space<vmem>>) attributes {dimension_semantics = [#tpu.dimension_semantics<parallel>], iteration_bounds = array<i64: 3>, scalar_prefetch = 0 : i64, scratch_operands = 0 : i64, tpu.core_type = #tpu.core_type<tc>, window_params = [{transform_indices = @transform_0, window_bounds = array<i64: 128, 256>}, {transform_indices = @transform_1, window_bounds = array<i64: 128, 1>}, {pipeline_mode = #tpu.pipeline_mode<synchronous>, transform_indices = @transform_2, window_bounds = array<i64: 256, 8>}, {transform_indices = @transform_3, window_bounds = array<i64: 1, 8, 128>}, {transform_indices = @transform_4, window_bounds = array<i64: 1, 8, 128>}]} {
    %c0 = arith.constant 0 : index
    %c0_0 = arith.constant 0 : index
    %0 = vector.load %arg1[%c0, %c0_0] : memref<128x256xf32, #tpu.memory_space<vmem>>, vector<128x256xf32>
    %1 = tpu.iota {dimensions = array<i32: 1>} : vector<128x256xi32>
    %2 = tpu.iota {dimensions = array<i32: 0>} : vector<128x1xi32>
    %c128_i32 = arith.constant 128 : i32
    %3 = arith.muli %arg0, %c128_i32 : i32
    %4 = vector.broadcast %3 : i32 to vector<128x1xi32>
    %5 = arith.addi %4, %2 : vector<128x1xi32>
    %c300_i32 = arith.constant 300 : i32
    %6 = vector.broadcast %c300_i32 : i32 to vector<128x1xi32>
    %7 = arith.cmpi slt, %5, %6 : vector<128x1xi32>
    %c0_1 = arith.constant 0 : index
    %c0_2 = arith.constant 0 : index
    %8 = vector.load %arg2[%c0_1, %c0_2] : memref<128x1xi32, #tpu.memory_space<vmem>>, vector<128x1xi32>
    %9 = vector.broadcast %8 : vector<128x1xi32> to vector<128x256xi32>
    %10 = arith.cmpi eq, %1, %9 : vector<128x256xi32>
    %cst = arith.constant dense<0xFF800000> : vector<128xf32>
    %11 = vector.multi_reduction <maximumf>, %0, %cst [1] : vector<128x256xf32> to vector<128xf32>
    %12 = vector.shape_cast %11 : vector<128xf32> to vector<128x1xf32>
    %13 = vector.broadcast %12 : vector<128x1xf32> to vector<128x256xf32>
    %14 = arith.subf %0, %13 : vector<128x256xf32>
    %15 = math.exp %14 : vector<128x256xf32>
    %cst_3 = arith.constant dense<0.000000e+00> : vector<128xf32>
    %16 = vector.multi_reduction <add>, %15, %cst_3 [1] : vector<128x256xf32> to vector<128xf32>
    %17 = vector.shape_cast %16 : vector<128xf32> to vector<128x1xf32>
    %18 = math.log %17 : vector<128x1xf32>
    %19 = arith.addf %12, %18 : vector<128x1xf32>
    %cst_4 = arith.constant 0.000000e+00 : f32
    %20 = vector.broadcast %cst_4 : f32 to vector<128x256xf32>
    %21 = arith.select %10, %0, %20 : vector<128x256xi1>, vector<128x256xf32>
    %cst_5 = arith.constant dense<0.000000e+00> : vector<128xf32>
    %22 = vector.multi_reduction <add>, %21, %cst_5 [1] : vector<128x256xf32> to vector<128xf32>
    %23 = vector.shape_cast %22 : vector<128xf32> to vector<128x1xf32>
    %24 = arith.subf %19, %23 : vector<128x1xf32>
    %cst_6 = arith.constant 0.000000e+00 : f32
    %25 = vector.broadcast %cst_6 : f32 to vector<128x1xf32>
    %26 = arith.select %7, %24, %25 : vector<128x1xi1>, vector<128x1xf32>
    %27 = vector.shape_cast %26 : vector<128x1xf32> to vector<1x128x1xf32>
    %cst_7 = arith.constant dense<0.000000e+00> : vector<1xf32>
    %28 = vector.multi_reduction <add>, %27, %cst_7 [1, 2] : vector<1x128x1xf32> to vector<1xf32>
    %29 = vector.shape_cast %28 : vector<1xf32> to vector<1x1x1xf32>
    %30 = vector.extract %29[0, 0, 0] : f32 from vector<1x1x1xf32>
    %31 = vector.broadcast %12 : vector<128x1xf32> to vector<128x256xf32>
    %32 = arith.cmpf oeq, %0, %31 : vector<128x256xf32>
    %c256_i32 = arith.constant 256 : i32
    %33 = vector.broadcast %c256_i32 : i32 to vector<128x256xi32>
    %34 = arith.select %32, %1, %33 : vector<128x256xi1>, vector<128x256xi32>
    %cst_8 = arith.constant dense<2147483647> : vector<128xi32>
    %35 = vector.multi_reduction <minsi>, %34, %cst_8 [1] : vector<128x256xi32> to vector<128xi32>
    %36 = vector.shape_cast %35 : vector<128xi32> to vector<128x1xi32>
    %37 = vector.broadcast %36 : vector<128x1xi32> to vector<128x256xi32>
    %38 = arith.cmpi eq, %1, %37 : vector<128x256xi32>
    %39 = arith.extui %38 : vector<128x256xi1> to vector<128x256xi32>
    %40 = arith.sitofp %39 : vector<128x256xi32> to vector<128x256xf32>
    %c0_9 = arith.constant 0 : index
    %c0_10 = arith.constant 0 : index
    %41 = vector.load %arg3[%c0_9, %c0_10] : memref<256x8xf32, #tpu.memory_space<vmem>>, vector<256x8xf32>
    %cst_11 = arith.constant dense<0.000000e+00> : vector<128x8xf32>
    %42 = tpu.matmul %40, %41, %cst_11 {dimension_numbers = #tpu.dot_dimension_numbers<[1], [0], [0], [1], [0, 0, 1, 1], [], []>} : vector<128x256xf32>, vector<256x8xf32>, vector<128x8xf32> -> vector<128x8xf32>
    %43 = arith.extui %10 : vector<128x256xi1> to vector<128x256xi32>
    %44 = arith.sitofp %43 : vector<128x256xi32> to vector<128x256xf32>
    %c0_12 = arith.constant 0 : index
    %c0_13 = arith.constant 0 : index
    %45 = vector.load %arg3[%c0_12, %c0_13] : memref<256x8xf32, #tpu.memory_space<vmem>>, vector<256x8xf32>
    %cst_14 = arith.constant dense<0.000000e+00> : vector<128x8xf32>
    %46 = tpu.matmul %44, %45, %cst_14 {dimension_numbers = #tpu.dot_dimension_numbers<[1], [0], [0], [1], [0, 0, 1, 1], [], []>} : vector<128x256xf32>, vector<256x8xf32>, vector<128x8xf32> -> vector<128x8xf32>
    %47 = vector.extract_strided_slice %42 {offsets = [0, 0], sizes = [128, 1], strides = [1, 1]} : vector<128x8xf32> to vector<128x1xf32>
    %48 = vector.extract_strided_slice %42 {offsets = [0, 1], sizes = [128, 1], strides = [1, 1]} : vector<128x8xf32> to vector<128x1xf32>
    %49 = vector.extract_strided_slice %42 {offsets = [0, 2], sizes = [128, 1], strides = [1, 1]} : vector<128x8xf32> to vector<128x1xf32>
    %50 = vector.extract_strided_slice %42 {offsets = [0, 3], sizes = [128, 1], strides = [1, 1]} : vector<128x8xf32> to vector<128x1xf32>
    %51 = vector.extract_strided_slice %42 {offsets = [0, 4], sizes = [128, 1], strides = [1, 1]} : vector<128x8xf32> to vector<128x1xf32>
    %52 = vector.extract_strided_slice %46 {offsets = [0, 0], sizes = [128, 1], strides = [1, 1]} : vector<128x8xf32> to vector<128x1xf32>
    %53 = vector.extract_strided_slice %46 {offsets = [0, 1], sizes = [128, 1], strides = [1, 1]} : vector<128x8xf32> to vector<128x1xf32>
    %54 = vector.extract_strided_slice %46 {offsets = [0, 2], sizes = [128, 1], strides = [1, 1]} : vector<128x8xf32> to vector<128x1xf32>
    %55 = vector.extract_strided_slice %46 {offsets = [0, 3], sizes = [128, 1], strides = [1, 1]} : vector<128x8xf32> to vector<128x1xf32>
    %56 = vector.extract_strided_slice %46 {offsets = [0, 4], sizes = [128, 1], strides = [1, 1]} : vector<128x8xf32> to vector<128x1xf32>
    %57 = arith.mulf %52, %48 : vector<128x1xf32>
    %58 = arith.mulf %53, %47 : vector<128x1xf32>
    %59 = arith.subf %57, %58 : vector<128x1xf32>
    %60 = arith.mulf %54, %50 : vector<128x1xf32>
    %61 = arith.mulf %55, %49 : vector<128x1xf32>
    %62 = arith.subf %60, %61 : vector<128x1xf32>
    %63 = arith.mulf %59, %59 : vector<128x1xf32>
    %64 = arith.mulf %51, %56 : vector<128x1xf32>
    %65 = arith.mulf %64, %62 : vector<128x1xf32>
    %66 = arith.mulf %65, %62 : vector<128x1xf32>
    %67 = arith.addf %63, %66 : vector<128x1xf32>
    %cst_15 = arith.constant 0.000000e+00 : f32
    %cst_16 = arith.constant 1.000000e+00 : f32
    %68 = vector.broadcast %cst_15 : f32 to vector<128x1xf32>
    %69 = arith.maximumf %68, %67 : vector<128x1xf32>
    %70 = vector.broadcast %cst_16 : f32 to vector<128x1xf32>
    %71 = arith.minimumf %70, %69 : vector<128x1xf32>
    %72 = math.sqrt %71 : vector<128x1xf32>
    %cst_17 = arith.constant -0.0012624911 : f32
    %73 = vector.broadcast %cst_17 : f32 to vector<128x1xf32>
    %74 = arith.mulf %73, %72 : vector<128x1xf32>
    %cst_18 = arith.constant 6.670090e-03 : f32
    %75 = vector.broadcast %cst_18 : f32 to vector<128x1xf32>
    %76 = arith.addf %74, %75 : vector<128x1xf32>
    %77 = arith.mulf %76, %72 : vector<128x1xf32>
    %cst_19 = arith.constant -0.0170881264 : f32
    %78 = vector.broadcast %cst_19 : f32 to vector<128x1xf32>
    %79 = arith.addf %77, %78 : vector<128x1xf32>
    %80 = arith.mulf %79, %72 : vector<128x1xf32>
    %cst_20 = arith.constant 0.0308918804 : f32
    %81 = vector.broadcast %cst_20 : f32 to vector<128x1xf32>
    %82 = arith.addf %80, %81 : vector<128x1xf32>
    %83 = arith.mulf %82, %72 : vector<128x1xf32>
    %cst_21 = arith.constant -0.0501743034 : f32
    %84 = vector.broadcast %cst_21 : f32 to vector<128x1xf32>
    %85 = arith.addf %83, %84 : vector<128x1xf32>
    %86 = arith.mulf %85, %72 : vector<128x1xf32>
    %cst_22 = arith.constant 0.0889789909 : f32
    %87 = vector.broadcast %cst_22 : f32 to vector<128x1xf32>
    %88 = arith.addf %86, %87 : vector<128x1xf32>
    %89 = arith.mulf %88, %72 : vector<128x1xf32>
    %cst_23 = arith.constant -0.214598805 : f32
    %90 = vector.broadcast %cst_23 : f32 to vector<128x1xf32>
    %91 = arith.addf %89, %90 : vector<128x1xf32>
    %92 = arith.mulf %91, %72 : vector<128x1xf32>
    %cst_24 = arith.constant 1.57079625 : f32
    %93 = vector.broadcast %cst_24 : f32 to vector<128x1xf32>
    %94 = arith.addf %92, %93 : vector<128x1xf32>
    %cst_25 = arith.constant 1.000000e+00 : f32
    %95 = vector.broadcast %cst_25 : f32 to vector<128x1xf32>
    %96 = arith.subf %95, %72 : vector<128x1xf32>
    %cst_26 = arith.constant 0.000000e+00 : f32
    %97 = vector.broadcast %cst_26 : f32 to vector<128x1xf32>
    %98 = arith.maximumf %96, %97 : vector<128x1xf32>
    %99 = math.sqrt %98 : vector<128x1xf32>
    %100 = arith.mulf %99, %94 : vector<128x1xf32>
    %cst_27 = arith.constant 1.57079637 : f32
    %101 = vector.broadcast %cst_27 : f32 to vector<128x1xf32>
    %102 = arith.subf %101, %100 : vector<128x1xf32>
    %cst_28 = arith.constant 2.000000e+00 : f32
    %103 = vector.broadcast %cst_28 : f32 to vector<128x1xf32>
    %104 = arith.mulf %103, %102 : vector<128x1xf32>
    %cst_29 = arith.constant 6.371000e+03 : f32
    %105 = vector.broadcast %cst_29 : f32 to vector<128x1xf32>
    %106 = arith.mulf %104, %105 : vector<128x1xf32>
    %cst_30 = arith.constant 0.000000e+00 : f32
    %107 = vector.broadcast %cst_30 : f32 to vector<128x1xf32>
    %108 = arith.select %7, %106, %107 : vector<128x1xi1>, vector<128x1xf32>
    %109 = vector.shape_cast %108 : vector<128x1xf32> to vector<1x128x1xf32>
    %cst_31 = arith.constant dense<0.000000e+00> : vector<1xf32>
    %110 = vector.multi_reduction <add>, %109, %cst_31 [1, 2] : vector<1x128x1xf32> to vector<1xf32>
    %111 = vector.shape_cast %110 : vector<1xf32> to vector<1x1x1xf32>
    %112 = vector.extract %111[0, 0, 0] : f32 from vector<1x1x1xf32>
    %113 = vector.broadcast %30 : f32 to vector<1x8x128xf32>
    %c0_32 = arith.constant 0 : index
    %c0_33 = arith.constant 0 : index
    %c0_34 = arith.constant 0 : index
    %114 = vector.load %arg4[%c0_32, %c0_33, %c0_34] : memref<1x8x128xf32, #tpu.memory_space<vmem>>, vector<1x8x128xf32>
    tpu.vector_store %arg4[%c0_32, %c0_33, %c0_34], %113 {strides = array<i32>} : memref<1x8x128xf32, #tpu.memory_space<vmem>>, vector<1x8x128xf32>,
    %115 = vector.broadcast %112 : f32 to vector<1x8x128xf32>
    %c0_35 = arith.constant 0 : index
    %c0_36 = arith.constant 0 : index
    %c0_37 = arith.constant 0 : index
    %116 = vector.load %arg5[%c0_35, %c0_36, %c0_37] : memref<1x8x128xf32, #tpu.memory_space<vmem>>, vector<1x8x128xf32>
    tpu.vector_store %arg5[%c0_35, %c0_36, %c0_37], %115 {strides = array<i32>} : memref<1x8x128xf32, #tpu.memory_space<vmem>>, vector<1x8x128xf32>,
    return
  }
  func.func @transform_0(%arg0: i32) -> (i32, i32) {
    %c0_i32 = arith.constant 0 : i32
    %c0_i32_0 = arith.constant 0 : i32
    return %arg0, %c0_i32 : i32, i32
  }
  func.func @transform_1(%arg0: i32) -> (i32, i32) {
    %c0_i32 = arith.constant 0 : i32
    %c0_i32_0 = arith.constant 0 : i32
    return %arg0, %c0_i32 : i32, i32
  }
  func.func @transform_2(%arg0: i32) -> (i32, i32) {
    %c0_i32 = arith.constant 0 : i32
    %c0_i32_0 = arith.constant 0 : i32
    %c0_i32_1 = arith.constant 0 : i32
    return %c0_i32, %c0_i32_0 : i32, i32
  }
  func.func @transform_3(%arg0: i32) -> (i32, i32, i32) {
    %c0_i32 = arith.constant 0 : i32
    %c0_i32_0 = arith.constant 0 : i32
    %c0_i32_1 = arith.constant 0 : i32
    return %arg0, %c0_i32, %c0_i32_0 : i32, i32, i32
  }
  func.func @transform_4(%arg0: i32) -> (i32, i32, i32) {
    %c0_i32 = arith.constant 0 : i32
    %c0_i32_0 = arith.constant 0 : i32
    %c0_i32_1 = arith.constant 0 : i32
    return %arg0, %c0_i32, %c0_i32_0 : i32, i32, i32
  }
}

</mosaic_0001>

<llo_original>
// kernel: tpu_custom_call.1
$region0: #{tpu_custom_call.1}
  #allocation0 [shape = 'u32[]', space=smem, size = 0x4, offset = 0x4, fixed_abs, tag = 'smem constant byte address 0x4 - core index']
  #allocation1 [shape = 'u32[72,128]{1,0:T(1,128)}', space=vmem, size = 0x9000, scoped, tag = 'internal scratch']
  %s0 = inlined_call_operand.hbm [shape: f32[300,256], index: 0, kind: input, shape index: {}]
  %s1 = inlined_call_operand.vmem [shape: s32[300,1], index: 1, kind: input, shape index: {}]
  %s2 = inlined_call_operand.vmem [shape: f32[256,8], index: 2, kind: input, shape index: {}]
  %s3 = inlined_call_operand.hbm [shape: f32[3,8,128], index: 3, kind: output, shape index: {0}]
  %s4 = inlined_call_operand.hbm [shape: f32[3,8,128], index: 4, kind: output, shape index: {1}]
  %5 = xla_tuple %s3, %s4
  %s6 = sld [smem:[#allocation0]]
  $region57: #{tpu_custom_call.1} parent=0
    _
  %s8 = ssub.s32 1, %s6
  %s9 = scalar_select 0, %s8, %s6
  $region1: #{tpu_custom_call.1} parent=0
    #allocation2 [shape = 'u8[262144]{0}', space=vmem, size = 0x40000, scoped, tag = 'input window, operand 0']
    #allocation3 [shape = 's32[2]{0}', space=sflag, size = 0x8, scoped, tag = 'scoped memory for tpu_custom_call.1']
    #allocation4 [shape = 's32[2]{0}', space=sflag, size = 0x8, scoped, tag = 'scoped memory for tpu_custom_call.1']
    #allocation5 [shape = 'u8[8192]{0}', space=vmem, size = 0x2000, scoped, tag = 'output window, operand 0']
    #allocation6 [shape = 'u8[8192]{0}', space=vmem, size = 0x2000, scoped, tag = 'output window, operand 1']
    #allocation7 [shape = 's32[2]{0}', space=sflag, size = 0x8, scoped, tag = 'scoped memory for tpu_custom_call.1']
    %10 = vsyncpa [#allocation3], 0
    %s11 = scalar_lea.sflag [#allocation3], 1
    %12 = vsyncpa %s11, 0
    %13 = vsyncpa [#allocation4], 0
    %s14 = scalar_lea.sflag [#allocation4], 1
    %15 = vsyncpa %s14, 0
    %16 = vsyncpa [#allocation7], 0
    %s17 = scalar_lea.sflag [#allocation7], 1
    %18 = vsyncpa %s17, 0
    loop: start=0, step=1, limit=5
    $region2: #{tpu_custom_call.1} parent=1 // loop_pre_header
      _
    $region3: #{tpu_custom_call.1} parent=1 // loop_header
      %s20 = sphi 0, %s24
      %p21 = scmp.ge.s32.totalorder %s20, 5
      %s30 = sphi 0, %s32
      %s33 = sphi 0, %s30
      %s34 = sphi 0, %s33
      %s50 = sphi 0, %s34
      %s56 = sphi 0, %s58
      %s59 = sphi 0, %s56
      %s60 = sphi 0, %s59
      %s76 = sphi 0, %s60
      %s80 = sphi 0, %s80
      %s82 = sphi 0, %s80
      %s83 = sphi 0, %s82
      %s97 = sphi 0, %s83
      %s103 = sphi 0, %s105
      %s106 = sphi 0, %s103
      %s107 = sphi 0, %s106
      %s123 = sphi 0, %s107
      %s129 = sphi 0, %s131
      %s132 = sphi 0, %s129
      %s133 = sphi 0, %s132
      %s149 = sphi 0, %s133
    $region4: #{tpu_custom_call.1} parent=1 // loop_header_branch
      %23 = sbr.rel (%p21) target = $region8
    $region5: #{tpu_custom_call.1} parent=1 // loop_body
      %s25 = ssub.s32 %s20, 1
      %s26 = ssub.s32 %s20, 2
      %s27 = sadd.s32 %s20, 1
      %s28 = ssub.s32 %s20, %s27
      %p29 = scmp.eq.s32.totalorder %s28, 0
      %s31 = sadd.s32 %s30, 1
      %s32 = scalar_select %p29, %s30, %s31
      %p35 = pneg %p29
      %p36 = scmp.eq.s32.totalorder %s20, 2
      %p37 = por %p35, %p36
      %p38 = scmp.ne.s32.totalorder %s30, %s33
      %p39 = scmp.eq.s32.totalorder %s20, 0
      %p40 = por %p38, %p39
      %p41 = scmp.ne.s32.totalorder %s30, %s33
      %p42 = scmp.eq.s32.totalorder %s25, 2
      %p43 = por %p41, %p42
      %p44 = scmp.ne.s32.totalorder %s33, %s34
      %p45 = scmp.eq.s32.totalorder %s25, 0
      %p46 = por %p44, %p45
      %p47 = scmp.ne.s32.totalorder %s33, %s34
      %p48 = scmp.eq.s32.totalorder %s26, 2
      %p49 = por %p47, %p48
      %p51 = scmp.ne.s32.totalorder %s34, %s50
      %p52 = scmp.eq.s32.totalorder %s26, 0
      %p53 = por %p51, %p52
      %s54 = ssub.s32 %s20, %s27
      %p55 = scmp.eq.s32.totalorder %s54, 0
      %s57 = sadd.s32 %s56, 1
      %s58 = scalar_select %p55, %s56, %s57
      %p61 = pneg %p55
      %p62 = scmp.eq.s32.totalorder %s20, 2
      %p63 = por %p61, %p62
      %p64 = scmp.ne.s32.totalorder %s56, %s59
      %p65 = scmp.eq.s32.totalorder %s20, 0
      %p66 = por %p64, %p65
      %p67 = scmp.ne.s32.totalorder %s56, %s59
      %p68 = scmp.eq.s32.totalorder %s25, 2
      %p69 = por %p67, %p68
      %p70 = scmp.ne.s32.totalorder %s59, %s60
      %p71 = scmp.eq.s32.totalorder %s25, 0
      %p72 = por %p70, %p71
      %p73 = scmp.ne.s32.totalorder %s59, %s60
      %p74 = scmp.eq.s32.totalorder %s26, 2
      %p75 = por %p73, %p74
      %p77 = scmp.ne.s32.totalorder %s60, %s76
      %p78 = scmp.eq.s32.totalorder %s26, 0
      %p79 = por %p77, %p78
      %s81 = sadd.s32 %s80, 1
      %p84 = scmp.eq.s32.totalorder %s20, 2
      %p85 = scmp.ne.s32.totalorder %s80, %s82
      %p86 = scmp.eq.s32.totalorder %s20, 0
      %p87 = por %p85, %p86
      %p88 = scmp.ne.s32.totalorder %s80, %s82
      %p89 = scmp.eq.s32.totalorder %s25, 2
      %p90 = por %p88, %p89
      %p91 = scmp.ne.s32.totalorder %s82, %s83
      %p92 = scmp.eq.s32.totalorder %s25, 0
      %p93 = por %p91, %p92
      %p94 = scmp.ne.s32.totalorder %s82, %s83
      %p95 = scmp.eq.s32.totalorder %s26, 2
      %p96 = por %p94, %p95
      %p98 = scmp.ne.s32.totalorder %s83, %s97
      %p99 = scmp.eq.s32.totalorder %s26, 0
      %p100 = por %p98, %p99
      %s101 = ssub.s32 %s20, %s27
      %p102 = scmp.eq.s32.totalorder %s101, 0
      %s104 = sadd.s32 %s103, 1
      %s105 = scalar_select %p102, %s103, %s104
      %p108 = pneg %p102
      %p109 = scmp.eq.s32.totalorder %s20, 2
      %p110 = por %p108, %p109
      %p111 = scmp.ne.s32.totalorder %s103, %s106
      %p112 = scmp.eq.s32.totalorder %s20, 0
      %p113 = por %p111, %p112
      %p114 = scmp.ne.s32.totalorder %s103, %s106
      %p115 = scmp.eq.s32.totalorder %s25, 2
      %p116 = por %p114, %p115
      %p117 = scmp.ne.s32.totalorder %s106, %s107
      %p118 = scmp.eq.s32.totalorder %s25, 0
      %p119 = por %p117, %p118
      %p120 = scmp.ne.s32.totalorder %s106, %s107
      %p121 = scmp.eq.s32.totalorder %s26, 2
      %p122 = por %p120, %p121
      %p124 = scmp.ne.s32.totalorder %s107, %s123
      %p125 = scmp.eq.s32.totalorder %s26, 0
      %p126 = por %p124, %p125
      %s127 = ssub.s32 %s20, %s27
      %p128 = scmp.eq.s32.totalorder %s127, 0
      %s130 = sadd.s32 %s129, 1
      %s131 = scalar_select %p128, %s129, %s130
      %p134 = pneg %p128
      %p135 = scmp.eq.s32.totalorder %s20, 2
      %p136 = por %p134, %p135
      %p137 = scmp.ne.s32.totalorder %s129, %s132
      %p138 = scmp.eq.s32.totalorder %s20, 0
      %p139 = por %p137, %p138
      %p140 = scmp.ne.s32.totalorder %s129, %s132
      %p141 = scmp.eq.s32.totalorder %s25, 2
      %p142 = por %p140, %p141
      %p143 = scmp.ne.s32.totalorder %s132, %s133
      %p144 = scmp.eq.s32.totalorder %s25, 0
      %p145 = por %p143, %p144
      %p146 = scmp.ne.s32.totalorder %s132, %s133
      %p147 = scmp.eq.s32.totalorder %s26, 2
      %p148 = por %p146, %p147
      %p150 = scmp.ne.s32.totalorder %s133, %s149
      %p151 = scmp.eq.s32.totalorder %s26, 0
      %p152 = por %p150, %p151
      %p153 = scmp.le.s32.totalorder 1, %s20
      %p154 = scmp.lt.s32.totalorder %s20, 4
      %p155 = pnand %p153, %p154
      %p156 = pneg %p155
      // Predicated region
      $region9: #{tpu_custom_call.1} parent=5 // pred_check
        _
      $region10: #{tpu_custom_call.1} parent=5 // pred_check_branch
        %158 = sbr.rel (%p155) target = $region12
      $region11: #{tpu_custom_call.1} parent=5 // pred_region
        %s159 = ssub.s32 %s20, 1
        // Predicated region
        $region13: #{tpu_custom_call.1} parent=11 // pred_check
          %p160 = pneg %p93
        $region14: #{tpu_custom_call.1} parent=11 // pred_check_branch
          %162 = sbr.rel (%p160) target = $region16
        $region15: #{tpu_custom_call.1} parent=11 // pred_region
          _
        $region16: #{tpu_custom_call.1} parent=11 // pred_fallthru
          _
      $region12: #{tpu_custom_call.1} parent=5 // pred_fallthru
        _
      %p163 = scmp.lt.s32.totalorder %s20, 3
      // Predicated region
      $region17: #{tpu_custom_call.1} parent=5 // pred_check
        %p164 = pneg %p163
      $region18: #{tpu_custom_call.1} parent=5 // pred_check_branch
        %166 = sbr.rel (%p164) target = $region20
      $region19: #{tpu_custom_call.1} parent=5 // pred_region
        // Predicated region
        $region21: #{tpu_custom_call.1} parent=19 // pred_check
          %p167 = pneg %p40
        $region22: #{tpu_custom_call.1} parent=19 // pred_check_branch
          %169 = sbr.rel (%p167) target = $region24
        $region23: #{tpu_custom_call.1} parent=19 // pred_region
          %s170 = sand.u32 %s30, 1
          %s171 = scalar_lea.sflag [#allocation3], %s170
          %s172 = sand.u32 %s30, 1
          %s173 = smul.addr %s172, 256
          %s174 = scalar_lea.vmem [#allocation2], %s173
          %s175 = smul.u32 16, %s20
          %s176 = ssub.s32 38, %s175
          %p177 = scmp.lt.s32.totalorder %s176, 16
          %s178 = scalar_select %p177, %s176, 16
          %s179 = smul.u32 8, %s178
          %s180 = smul.u32 %s179, 2
          %s181 = ssub.s32 256, %s180
          %s182 = sshll.u32 %s181, 4
          %183 = vsyncadd %s171, %s182
          %p184 = scmp.ne.s32.totalorder 0, %s180
          %s185 = smul.addr %s175, 2
          %s186 = smul.addr %s185, 8
          %s187 = scalar_lea.hbm %s0, %s186
          %s188 = smul.u32 16, %s178
          %s189 = sshll.u32 %s187, 4
          %s190 = int_to_ptr.hbm [resolvable:$true] %s189
          %s191 = sshll.u32 %s174, 4
          %s192 = int_to_ptr.vmem [resolvable:$true] %s191
          %s193 = sshll.u32 %s188, 4
          %197 = dma.hbm_to_vmem [thread:$0]  (%p184), %s190, %s193, %s192, %s171, 256, 256, 16
        $region24: #{tpu_custom_call.1} parent=19 // pred_fallthru
          _
        // Predicated region
        $region25: #{tpu_custom_call.1} parent=19 // pred_check
          %p198 = pneg %p66
        $region26: #{tpu_custom_call.1} parent=19 // pred_check_branch
          %200 = sbr.rel (%p198) target = $region28
        $region27: #{tpu_custom_call.1} parent=19 // pred_region
          %s201 = smul.u32 16, %s20
          %s202 = ssub.s32 38, %s201
          %p203 = scmp.lt.s32.totalorder %s202, 16
          %s204 = scalar_select %p203, %s202, 16
          %s205 = smul.u32 8, %s204
          %p206 = scmp.lt.s32.totalorder %s201, 37
          %s207 = scalar_select %p206, %s201, 37
          %s208 = smul.addr %s207, 8
          %s209 = scalar_lea.vmem %s1, %s208
          %s210 = smul.u32 16, %s20
          %s211 = ssub.s32 38, %s210
          %p212 = scmp.lt.s32.totalorder %s211, 16
          %s213 = scalar_select %p212, %s211, 16
          %s214 = smul.u32 8, %s213
        $region28: #{tpu_custom_call.1} parent=19 // pred_fallthru
          _
      $region20: #{tpu_custom_call.1} parent=5 // pred_fallthru
        _
      %p215 = scmp.le.s32.totalorder 1, %s20
      %p216 = scmp.lt.s32.totalorder %s20, 4
      %p217 = pnand %p215, %p216
      %p218 = pneg %p217
      // Predicated region
      $region29: #{tpu_custom_call.1} parent=5 // pred_check
        _
      $region30: #{tpu_custom_call.1} parent=5 // pred_check_branch
        %220 = sbr.rel (%p217) target = $region32
      $region31: #{tpu_custom_call.1} parent=5 // pred_region
        %s221 = ssub.s32 %s20, 1
        %s222 = sand.u32 %s33, 1
        %s223 = scalar_lea.sflag [#allocation3], %s222
        %s224 = sand.u32 %s33, 1
        %s225 = smul.addr %s224, 256
        %s226 = scalar_lea.vmem [#allocation2], %s225
        // Predicated region
        $region33: #{tpu_custom_call.1} parent=31 // pred_check
          %p227 = pneg %p46
        $region34: #{tpu_custom_call.1} parent=31 // pred_check_branch
          %229 = sbr.rel (%p227) target = $region36
        $region35: #{tpu_custom_call.1} parent=31 // pred_region
          %231 = dma.done %s223, 4096
        $region36: #{tpu_custom_call.1} parent=31 // pred_fallthru
          _
        %s232 = sand.u32 %s33, 1
        %s233 = scalar_lea.sflag [#allocation3], %s232
        %s234 = sand.u32 %s33, 1
        %s235 = smul.addr %s234, 256
        %s236 = scalar_lea.vmem [#allocation2], %s235
        %p237 = pneg %p46
        %p238 = pneg %p43
        %s239 = smul.u32 16, %s25
        %s240 = ssub.s32 38, %s239
        %p241 = scmp.lt.s32.totalorder %s240, 16
        %s242 = scalar_select %p241, %s240, 16
        %s243 = smul.u32 8, %s242
        %p244 = scmp.lt.s32.totalorder %s239, 37
        %s245 = scalar_select %p244, %s239, 37
        %s246 = smul.addr %s245, 8
        %s247 = scalar_lea.vmem %s1, %s246
        %p248 = pneg %p72
        %p249 = pneg %p69
        %p250 = pneg %p93
        %p251 = pneg %p90
        %p252 = pneg %p119
        %p253 = pneg %p116
        %s254 = sand.u32 %s106, 1
        %s255 = scalar_lea.sflag [#allocation4], %s254
        %s256 = sand.u32 %s106, 1
        %s257 = smul.addr %s256, 8
        %s258 = scalar_lea.vmem [#allocation5], %s257
        %p259 = pneg %p145
        %p260 = pneg %p142
        %s261 = sand.u32 %s132, 1
        %s262 = scalar_lea.sflag [#allocation7], %s261
        %s263 = sand.u32 %s132, 1
        %s264 = smul.addr %s263, 8
        %s265 = scalar_lea.vmem [#allocation6], %s264
        %s266 = smul.u32 16, %s25
        %s267 = ssub.s32 38, %s266
        %p268 = scmp.lt.s32.totalorder %s267, 16
        %s269 = scalar_select %p268, %s267, 16
        %s270 = smul.u32 8, %s269
        %s271 = smul.u32 %s270, 2
        %s272 = smul.u32 16, %s25
        %s273 = ssub.s32 38, %s272
        %p274 = scmp.lt.s32.totalorder %s273, 16
        %s275 = scalar_select %p274, %s273, 16
        %s276 = smul.u32 8, %s275
        %p277 = scmp.lt.s32.totalorder %s272, 37
        %s278 = scalar_select %p277, %s272, 37
        %s279 = smul.addr %s278, 8
        %s280 = scalar_lea.vmem %s1, %s279
        %s281 = smul.u32 16, %s25
        %s282 = ssub.s32 38, %s281
        %p283 = scmp.lt.s32.totalorder %s282, 16
        %s284 = scalar_select %p283, %s282, 16
        %s285 = smul.u32 8, %s284
        %v286 = vld [vmem:[%s226] sm:$0xff]
        %v287 = vld [vmem:[%s226 + $0x8] sm:$0xff]
        %v288 = vld [vmem:[%s226 + $0x10] sm:$0xff]
        %v289 = vld [vmem:[%s226 + $0x18] sm:$0xff]
        %v290 = vld [vmem:[%s226 + $0x20] sm:$0xff]
        %v291 = vld [vmem:[%s226 + $0x28] sm:$0xff]
        %v292 = vld [vmem:[%s226 + $0x30] sm:$0xff]
        %v293 = vld [vmem:[%s226 + $0x38] sm:$0xff]
        %v294 = vld [vmem:[%s226 + $0x40] sm:$0xff]
        %v295 = vld [vmem:[%s226 + $0x48] sm:$0xff]
        %v296 = vld [vmem:[%s226 + $0x50] sm:$0xff]
        %v297 = vld [vmem:[%s226 + $0x58] sm:$0xff]
        %v298 = vld [vmem:[%s226 + $0x60] sm:$0xff]
        %v299 = vld [vmem:[%s226 + $0x68] sm:$0xff]
        %v300 = vld [vmem:[%s226 + $0x70] sm:$0xff]
        %v301 = vld [vmem:[%s226 + $0x78] sm:$0xff]
        %v302 = vld [vmem:[%s226 + $0x80] sm:$0xff]
        %v303 = vld [vmem:[%s226 + $0x88] sm:$0xff]
        %v304 = vld [vmem:[%s226 + $0x90] sm:$0xff]
        %v305 = vld [vmem:[%s226 + $0x98] sm:$0xff]
        %v306 = vld [vmem:[%s226 + $0xa0] sm:$0xff]
        %v307 = vld [vmem:[%s226 + $0xa8] sm:$0xff]
        %v308 = vld [vmem:[%s226 + $0xb0] sm:$0xff]
        %v309 = vld [vmem:[%s226 + $0xb8] sm:$0xff]
        %v310 = vld [vmem:[%s226 + $0xc0] sm:$0xff]
        %v311 = vld [vmem:[%s226 + $0xc8] sm:$0xff]
        %v312 = vld [vmem:[%s226 + $0xd0] sm:$0xff]
        %v313 = vld [vmem:[%s226 + $0xd8] sm:$0xff]
        %v314 = vld [vmem:[%s226 + $0xe0] sm:$0xff]
        %v315 = vld [vmem:[%s226 + $0xe8] sm:$0xff]
        %v316 = vld [vmem:[%s226 + $0xf0] sm:$0xff]
        %v317 = vld [vmem:[%s226 + $0xf8] sm:$0xff]
        %v318 = vlaneseq
        %v319 = vand.u32 %v318, 127
        %v320 = vadd.s32 %v319, 128
        %v321 = vlaneseq
        %v322 = vshrl.u32 %v321, 7
        %v323 = vadd.s32 %v322, 8
        %v324 = vadd.s32 %v322, 16
        %v325 = vadd.s32 %v322, 24
        %v326 = vadd.s32 %v322, 32
        %v327 = vadd.s32 %v322, 40
        %v328 = vadd.s32 %v322, 48
        %v329 = vadd.s32 %v322, 56
        %v330 = vadd.s32 %v322, 64
        %v331 = vadd.s32 %v322, 72
        %v332 = vadd.s32 %v322, 80
        %v333 = vadd.s32 %v322, 88
        %v334 = vadd.s32 %v322, 96
        %v335 = vadd.s32 %v322, 104
        %v336 = vadd.s32 %v322, 112
        %v337 = vadd.s32 %v322, 120
        %s338 = smul.u32 %s25, 128
        %v339 = vstv %s338
        %v340 = vadd.s32 %v339, %v322
        %v341 = vadd.s32 %v339, %v323
        %v342 = vadd.s32 %v339, %v324
        %v343 = vadd.s32 %v339, %v325
        %v344 = vadd.s32 %v339, %v326
        %v345 = vadd.s32 %v339, %v327
        %v346 = vadd.s32 %v339, %v328
        %v347 = vadd.s32 %v339, %v329
        %v348 = vadd.s32 %v339, %v330
        %v349 = vadd.s32 %v339, %v331
        %v350 = vadd.s32 %v339, %v332
        %v351 = vadd.s32 %v339, %v333
        %v352 = vadd.s32 %v339, %v334
        %v353 = vadd.s32 %v339, %v335
        %v354 = vadd.s32 %v339, %v336
        %v355 = vadd.s32 %v339, %v337
        %vm356 = vcmp.lt.s32.totalorder %v340, 300
        %vm357 = vcmp.lt.s32.totalorder %v341, 300
        %vm358 = vcmp.lt.s32.totalorder %v342, 300
        %vm359 = vcmp.lt.s32.totalorder %v343, 300
        %vm360 = vcmp.lt.s32.totalorder %v344, 300
        %vm361 = vcmp.lt.s32.totalorder %v345, 300
        %vm362 = vcmp.lt.s32.totalorder %v346, 300
        %vm363 = vcmp.lt.s32.totalorder %v347, 300
        %vm364 = vcmp.lt.s32.totalorder %v348, 300
        %vm365 = vcmp.lt.s32.totalorder %v349, 300
        %vm366 = vcmp.lt.s32.totalorder %v350, 300
        %vm367 = vcmp.lt.s32.totalorder %v351, 300
        %vm368 = vcmp.lt.s32.totalorder %v352, 300
        %vm369 = vcmp.lt.s32.totalorder %v353, 300
        %vm370 = vcmp.lt.s32.totalorder %v354, 300
        %vm371 = vcmp.lt.s32.totalorder %v355, 300
        %v372 = vld [vmem:[%s280] sm:$0xff]
        %v373 = vld [vmem:[%s280 + $0x8] sm:$0xff]
        %v374 = vld [vmem:[%s280 + $0x10] sm:$0xff]
        %v375 = vld [vmem:[%s280 + $0x18] sm:$0xff]
        %v376 = vld [vmem:[%s280 + $0x20] sm:$0xff]
        %v377 = vld [vmem:[%s280 + $0x28] sm:$0xff]
        %v378 = vld [vmem:[%s280 + $0x30] sm:$0xff]
        %v379 = vld [vmem:[%s280 + $0x38] sm:$0xff]
        %v380 = vld [vmem:[%s280 + $0x40] sm:$0xff]
        %v381 = vld [vmem:[%s280 + $0x48] sm:$0xff]
        %v382 = vld [vmem:[%s280 + $0x50] sm:$0xff]
        %v383 = vld [vmem:[%s280 + $0x58] sm:$0xff]
        %v384 = vld [vmem:[%s280 + $0x60] sm:$0xff]
        %v385 = vld [vmem:[%s280 + $0x68] sm:$0xff]
        %v386 = vld [vmem:[%s280 + $0x70] sm:$0xff]
        %v387 = vld [vmem:[%s280 + $0x78] sm:$0xff]
        %388 = vset.pattern.permute.xlu0 0
        %389 = vperm.xlu0 %388, %v372
        %v390 = vpop.permute.xlu0 %389
        %391 = vset.pattern.permute.xlu0 0
        %392 = vperm.xlu0 %391, %v373
        %v393 = vpop.permute.xlu0 %392
        %394 = vset.pattern.permute.xlu0 0
        %395 = vperm.xlu0 %394, %v374
        %v396 = vpop.permute.xlu0 %395
        %397 = vset.pattern.permute.xlu0 0
        %398 = vperm.xlu0 %397, %v375
        %v399 = vpop.permute.xlu0 %398
        %400 = vset.pattern.permute.xlu0 0
        %401 = vperm.xlu0 %400, %v376
        %v402 = vpop.permute.xlu0 %401
        %403 = vset.pattern.permute.xlu0 0
        %404 = vperm.xlu0 %403, %v377
        %v405 = vpop.permute.xlu0 %404
        %406 = vset.pattern.permute.xlu0 0
        %407 = vperm.xlu0 %406, %v378
        %v408 = vpop.permute.xlu0 %407
        %409 = vset.pattern.permute.xlu0 0
        %410 = vperm.xlu0 %409, %v379
        %v411 = vpop.permute.xlu0 %410
        %412 = vset.pattern.permute.xlu0 0
        %413 = vperm.xlu0 %412, %v380
        %v414 = vpop.permute.xlu0 %413
        %415 = vset.pattern.permute.xlu0 0
        %416 = vperm.xlu0 %415, %v381
        %v417 = vpop.permute.xlu0 %416
        %418 = vset.pattern.permute.xlu0 0
        %419 = vperm.xlu0 %418, %v382
        %v420 = vpop.permute.xlu0 %419
        %421 = vset.pattern.permute.xlu0 0
        %422 = vperm.xlu0 %421, %v383
        %v423 = vpop.permute.xlu0 %422
        %424 = vset.pattern.permute.xlu0 0
        %425 = vperm.xlu0 %424, %v384
        %v426 = vpop.permute.xlu0 %425
        %427 = vset.pattern.permute.xlu0 0
        %428 = vperm.xlu0 %427, %v385
        %v429 = vpop.permute.xlu0 %428
        %430 = vset.pattern.permute.xlu0 0
        %431 = vperm.xlu0 %430, %v386
        %v432 = vpop.permute.xlu0 %431
        %433 = vset.pattern.permute.xlu0 0
        %434 = vperm.xlu0 %433, %v387
        %v435 = vpop.permute.xlu0 %434
        %vm436 = vcmp.eq.s32.totalorder %v319, %v390
        %vm437 = vcmp.eq.s32.totalorder %v320, %v390
        %vm438 = vcmp.eq.s32.totalorder %v319, %v393
        %vm439 = vcmp.eq.s32.totalorder %v320, %v393
        %vm440 = vcmp.eq.s32.totalorder %v319, %v396
        %vm441 = vcmp.eq.s32.totalorder %v320, %v396
        %vm442 = vcmp.eq.s32.totalorder %v319, %v399
        %vm443 = vcmp.eq.s32.totalorder %v320, %v399
        %vm444 = vcmp.eq.s32.totalorder %v319, %v402
        %vm445 = vcmp.eq.s32.totalorder %v320, %v402
        %vm446 = vcmp.eq.s32.totalorder %v319, %v405
        %vm447 = vcmp.eq.s32.totalorder %v320, %v405
        %vm448 = vcmp.eq.s32.totalorder %v319, %v408
        %vm449 = vcmp.eq.s32.totalorder %v320, %v408
        %vm450 = vcmp.eq.s32.totalorder %v319, %v411
        %vm451 = vcmp.eq.s32.totalorder %v320, %v411
        %vm452 = vcmp.eq.s32.totalorder %v319, %v414
        %vm453 = vcmp.eq.s32.totalorder %v320, %v414
        %vm454 = vcmp.eq.s32.totalorder %v319, %v417
        %vm455 = vcmp.eq.s32.totalorder %v320, %v417
        %vm456 = vcmp.eq.s32.totalorder %v319, %v420
        %vm457 = vcmp.eq.s32.totalorder %v320, %v420
        %vm458 = vcmp.eq.s32.totalorder %v319, %v423
        %vm459 = vcmp.eq.s32.totalorder %v320, %v423
        %vm460 = vcmp.eq.s32.totalorder %v319, %v426
        %vm461 = vcmp.eq.s32.totalorder %v320, %v426
        %vm462 = vcmp.eq.s32.totalorder %v319, %v429
        %vm463 = vcmp.eq.s32.totalorder %v320, %v429
        %vm464 = vcmp.eq.s32.totalorder %v319, %v432
        %vm465 = vcmp.eq.s32.totalorder %v320, %v432
        %vm466 = vcmp.eq.s32.totalorder %v319, %v435
        %vm467 = vcmp.eq.s32.totalorder %v320, %v435
        %v468 = vmax.f32 %v286, %v287
        %469 = vmax.xlane.f32.xlu0 %v468
        %v470 = vpop.xlane.xlu0 %469
        %v471 = vmax.f32 %v288, %v289
        %472 = vmax.xlane.f32.xlu0 %v471
        %v473 = vpop.xlane.xlu0 %472
        %v474 = vmax.f32 %v290, %v291
        %475 = vmax.xlane.f32.xlu0 %v474
        %v476 = vpop.xlane.xlu0 %475
        %v477 = vmax.f32 %v292, %v293
        %478 = vmax.xlane.f32.xlu0 %v477
        %v479 = vpop.xlane.xlu0 %478
        %v480 = vmax.f32 %v294, %v295
        %481 = vmax.xlane.f32.xlu0 %v480
        %v482 = vpop.xlane.xlu0 %481
        %v483 = vmax.f32 %v296, %v297
        %484 = vmax.xlane.f32.xlu0 %v483
        %v485 = vpop.xlane.xlu0 %484
        %v486 = vmax.f32 %v298, %v299
        %487 = vmax.xlane.f32.xlu0 %v486
        %v488 = vpop.xlane.xlu0 %487
        %v489 = vmax.f32 %v300, %v301
        %490 = vmax.xlane.f32.xlu0 %v489
        %v491 = vpop.xlane.xlu0 %490
        %v492 = vmax.f32 %v302, %v303
        %493 = vmax.xlane.f32.xlu0 %v492
        %v494 = vpop.xlane.xlu0 %493
        %v495 = vmax.f32 %v304, %v305
        %496 = vmax.xlane.f32.xlu0 %v495
        %v497 = vpop.xlane.xlu0 %496
        %v498 = vmax.f32 %v306, %v307
        %499 = vmax.xlane.f32.xlu0 %v498
        %v500 = vpop.xlane.xlu0 %499
        %v501 = vmax.f32 %v308, %v309
        %502 = vmax.xlane.f32.xlu0 %v501
        %v503 = vpop.xlane.xlu0 %502
        %v504 = vmax.f32 %v310, %v311
        %505 = vmax.xlane.f32.xlu0 %v504
        %v506 = vpop.xlane.xlu0 %505
        %v507 = vmax.f32 %v312, %v313
        %508 = vmax.xlane.f32.xlu0 %v507
        %v509 = vpop.xlane.xlu0 %508
        %v510 = vmax.f32 %v314, %v315
        %511 = vmax.xlane.f32.xlu0 %v510
        %v512 = vpop.xlane.xlu0 %511
        %v513 = vmax.f32 %v316, %v317
        %514 = vmax.xlane.f32.xlu0 %v513
        %v515 = vpop.xlane.xlu0 %514
        %v516 = vsub.f32 %v286, %v470
        %v517 = vsub.f32 %v287, %v470
        %v518 = vsub.f32 %v288, %v473
        %v519 = vsub.f32 %v289, %v473
        %v520 = vsub.f32 %v290, %v476
        %v521 = vsub.f32 %v291, %v476
        %v522 = vsub.f32 %v292, %v479
        %v523 = vsub.f32 %v293, %v479
        %v524 = vsub.f32 %v294, %v482
        %v525 = vsub.f32 %v295, %v482
        %v526 = vsub.f32 %v296, %v485
        %v527 = vsub.f32 %v297, %v485
        %v528 = vsub.f32 %v298, %v488
        %v529 = vsub.f32 %v299, %v488
        %v530 = vsub.f32 %v300, %v491
        %v531 = vsub.f32 %v301, %v491
        %v532 = vsub.f32 %v302, %v494
        %v533 = vsub.f32 %v303, %v494
        %v534 = vsub.f32 %v304, %v497
        %v535 = vsub.f32 %v305, %v497
        %v536 = vsub.f32 %v306, %v500
        %v537 = vsub.f32 %v307, %v500
        %v538 = vsub.f32 %v308, %v503
        %v539 = vsub.f32 %v309, %v503
        %v540 = vsub.f32 %v310, %v506
        %v541 = vsub.f32 %v311, %v506
        %v542 = vsub.f32 %v312, %v509
        %v543 = vsub.f32 %v313, %v509
        %v544 = vsub.f32 %v314, %v512
        %v545 = vsub.f32 %v315, %v512
        %v546 = vsub.f32 %v316, %v515
        %v547 = vsub.f32 %v317, %v515
        %v548 = vmul.f32 %v516, 1.442695
        %v549 = vpow.pop %v548
        %v550 = vmul.f32 %v517, 1.442695
        %v551 = vpow.pop %v550
        %v552 = vmul.f32 %v518, 1.442695
        %v553 = vpow.pop %v552
        %v554 = vmul.f32 %v519, 1.442695
        %v555 = vpow.pop %v554
        %v556 = vmul.f32 %v520, 1.442695
        %v557 = vpow.pop %v556
        %v558 = vmul.f32 %v521, 1.442695
        %v559 = vpow.pop %v558
        %v560 = vmul.f32 %v522, 1.442695
        %v561 = vpow.pop %v560
        %v562 = vmul.f32 %v523, 1.442695
        %v563 = vpow.pop %v562
        %v564 = vmul.f32 %v524, 1.442695
        %v565 = vpow.pop %v564
        %v566 = vmul.f32 %v525, 1.442695
        %v567 = vpow.pop %v566
        %v568 = vmul.f32 %v526, 1.442695
        %v569 = vpow.pop %v568
        %v570 = vmul.f32 %v527, 1.442695
        %v571 = vpow.pop %v570
        %v572 = vmul.f32 %v528, 1.442695
        %v573 = vpow.pop %v572
        %v574 = vmul.f32 %v529, 1.442695
        %v575 = vpow.pop %v574
        %v576 = vmul.f32 %v530, 1.442695
        %v577 = vpow.pop %v576
        %v578 = vmul.f32 %v531, 1.442695
        %v579 = vpow.pop %v578
        %v580 = vmul.f32 %v532, 1.442695
        %v581 = vpow.pop %v580
        %v582 = vmul.f32 %v533, 1.442695
        %v583 = vpow.pop %v582
        %v584 = vmul.f32 %v534, 1.442695
        %v585 = vpow.pop %v584
        %v586 = vmul.f32 %v535, 1.442695
        %v587 = vpow.pop %v586
        %v588 = vmul.f32 %v536, 1.442695
        %v589 = vpow.pop %v588
        %v590 = vmul.f32 %v537, 1.442695
        %v591 = vpow.pop %v590
        %v592 = vmul.f32 %v538, 1.442695
        %v593 = vpow.pop %v592
        %v594 = vmul.f32 %v539, 1.442695
        %v595 = vpow.pop %v594
        %v596 = vmul.f32 %v540, 1.442695
        %v597 = vpow.pop %v596
        %v598 = vmul.f32 %v541, 1.442695
        %v599 = vpow.pop %v598
        %v600 = vmul.f32 %v542, 1.442695
        %v601 = vpow.pop %v600
        %v602 = vmul.f32 %v543, 1.442695
        %v603 = vpow.pop %v602
        %v604 = vmul.f32 %v544, 1.442695
        %v605 = vpow.pop %v604
        %v606 = vmul.f32 %v545, 1.442695
        %v607 = vpow.pop %v606
        %v608 = vmul.f32 %v546, 1.442695
        %v609 = vpow.pop %v608
        %v610 = vmul.f32 %v547, 1.442695
        %v611 = vpow.pop %v610
        %v612 = vadd.f32 %v549, %v551
        %613 = vadd.xlane.f32.xlu0 %v612
        %v614 = vpop.xlane.xlu0 %613
        %v615 = vadd.f32 %v553, %v555
        %616 = vadd.xlane.f32.xlu0 %v615
        %v617 = vpop.xlane.xlu0 %616
        %v618 = vadd.f32 %v557, %v559
        %619 = vadd.xlane.f32.xlu0 %v618
        %v620 = vpop.xlane.xlu0 %619
        %v621 = vadd.f32 %v561, %v563
        %622 = vadd.xlane.f32.xlu0 %v621
        %v623 = vpop.xlane.xlu0 %622
        %v624 = vadd.f32 %v565, %v567
        %625 = vadd.xlane.f32.xlu0 %v624
        %v626 = vpop.xlane.xlu0 %625
        %v627 = vadd.f32 %v569, %v571
        %628 = vadd.xlane.f32.xlu0 %v627
        %v629 = vpop.xlane.xlu0 %628
        %v630 = vadd.f32 %v573, %v575
        %631 = vadd.xlane.f32.xlu0 %v630
        %v632 = vpop.xlane.xlu0 %631
        %v633 = vadd.f32 %v577, %v579
        %634 = vadd.xlane.f32.xlu0 %v633
        %v635 = vpop.xlane.xlu0 %634
        %v636 = vadd.f32 %v581, %v583
        %637 = vadd.xlane.f32.xlu0 %v636
        %v638 = vpop.xlane.xlu0 %637
        %v639 = vadd.f32 %v585, %v587
        %640 = vadd.xlane.f32.xlu0 %v639
        %v641 = vpop.xlane.xlu0 %640
        %v642 = vadd.f32 %v589, %v591
        %643 = vadd.xlane.f32.xlu0 %v642
        %v644 = vpop.xlane.xlu0 %643
        %v645 = vadd.f32 %v593, %v595
        %646 = vadd.xlane.f32.xlu0 %v645
        %v647 = vpop.xlane.xlu0 %646
        %v648 = vadd.f32 %v597, %v599
        %649 = vadd.xlane.f32.xlu0 %v648
        %v650 = vpop.xlane.xlu0 %649
        %v651 = vadd.f32 %v601, %v603
        %652 = vadd.xlane.f32.xlu0 %v651
        %v653 = vpop.xlane.xlu0 %652
        %v654 = vadd.f32 %v605, %v607
        %655 = vadd.xlane.f32.xlu0 %v654
        %v656 = vpop.xlane.xlu0 %655
        %v657 = vadd.f32 %v609, %v611
        %658 = vadd.xlane.f32.xlu0 %v657
        %v659 = vpop.xlane.xlu0 %658
        %v660 = vlog2.pop %v614
        %v661 = vmul.f32 %v660, 0.6931472
        %v662 = vlog2.pop %v617
        %v663 = vmul.f32 %v662, 0.6931472
        %v664 = vlog2.pop %v620
        %v665 = vmul.f32 %v664, 0.6931472
        %v666 = vlog2.pop %v623
        %v667 = vmul.f32 %v666, 0.6931472
        %v668 = vlog2.pop %v626
        %v669 = vmul.f32 %v668, 0.6931472
        %v670 = vlog2.pop %v629
        %v671 = vmul.f32 %v670, 0.6931472
        %v672 = vlog2.pop %v632
        %v673 = vmul.f32 %v672, 0.6931472
        %v674 = vlog2.pop %v635
        %v675 = vmul.f32 %v674, 0.6931472
        %v676 = vlog2.pop %v638
        %v677 = vmul.f32 %v676, 0.6931472
        %v678 = vlog2.pop %v641
        %v679 = vmul.f32 %v678, 0.6931472
        %v680 = vlog2.pop %v644
        %v681 = vmul.f32 %v680, 0.6931472
        %v682 = vlog2.pop %v647
        %v683 = vmul.f32 %v682, 0.6931472
        %v684 = vlog2.pop %v650
        %v685 = vmul.f32 %v684, 0.6931472
        %v686 = vlog2.pop %v653
        %v687 = vmul.f32 %v686, 0.6931472
        %v688 = vlog2.pop %v656
        %v689 = vmul.f32 %v688, 0.6931472
        %v690 = vlog2.pop %v659
        %v691 = vmul.f32 %v690, 0.6931472
        %v692 = vadd.f32 %v470, %v661
        %v693 = vadd.f32 %v473, %v663
        %v694 = vadd.f32 %v476, %v665
        %v695 = vadd.f32 %v479, %v667
        %v696 = vadd.f32 %v482, %v669
        %v697 = vadd.f32 %v485, %v671
        %v698 = vadd.f32 %v488, %v673
        %v699 = vadd.f32 %v491, %v675
        %v700 = vadd.f32 %v494, %v677
        %v701 = vadd.f32 %v497, %v679
        %v702 = vadd.f32 %v500, %v681
        %v703 = vadd.f32 %v503, %v683
        %v704 = vadd.f32 %v506, %v685
        %v705 = vadd.f32 %v509, %v687
        %v706 = vadd.f32 %v512, %v689
        %v707 = vadd.f32 %v515, %v691
        %v708 = vsel %vm436, %v286, 0.0
        %v709 = vsel %vm437, %v287, 0.0
        %v710 = vsel %vm438, %v288, 0.0
        %v711 = vsel %vm439, %v289, 0.0
        %v712 = vsel %vm440, %v290, 0.0
        %v713 = vsel %vm441, %v291, 0.0
        %v714 = vsel %vm442, %v292, 0.0
        %v715 = vsel %vm443, %v293, 0.0
        %v716 = vsel %vm444, %v294, 0.0
        %v717 = vsel %vm445, %v295, 0.0
        %v718 = vsel %vm446, %v296, 0.0
        %v719 = vsel %vm447, %v297, 0.0
        %v720 = vsel %vm448, %v298, 0.0
        %v721 = vsel %vm449, %v299, 0.0
        %v722 = vsel %vm450, %v300, 0.0
        %v723 = vsel %vm451, %v301, 0.0
        %v724 = vsel %vm452, %v302, 0.0
        %v725 = vsel %vm453, %v303, 0.0
        %v726 = vsel %vm454, %v304, 0.0
        %v727 = vsel %vm455, %v305, 0.0
        %v728 = vsel %vm456, %v306, 0.0
        %v729 = vsel %vm457, %v307, 0.0
        %v730 = vsel %vm458, %v308, 0.0
        %v731 = vsel %vm459, %v309, 0.0
        %v732 = vsel %vm460, %v310, 0.0
        %v733 = vsel %vm461, %v311, 0.0
        %v734 = vsel %vm462, %v312, 0.0
        %v735 = vsel %vm463, %v313, 0.0
        %v736 = vsel %vm464, %v314, 0.0
        %v737 = vsel %vm465, %v315, 0.0
        %v738 = vsel %vm466, %v316, 0.0
        %v739 = vsel %vm467, %v317, 0.0
        %v740 = vadd.f32 %v708, %v709
        %741 = vadd.xlane.f32.xlu0 %v740
        %v742 = vpop.xlane.xlu0 %741
        %v743 = vadd.f32 %v710, %v711
        %744 = vadd.xlane.f32.xlu0 %v743
        %v745 = vpop.xlane.xlu0 %744
        %v746 = vadd.f32 %v712, %v713
        %747 = vadd.xlane.f32.xlu0 %v746
        %v748 = vpop.xlane.xlu0 %747
        %v749 = vadd.f32 %v714, %v715
        %750 = vadd.xlane.f32.xlu0 %v749
        %v751 = vpop.xlane.xlu0 %750
        %v752 = vadd.f32 %v716, %v717
        %753 = vadd.xlane.f32.xlu0 %v752
        %v754 = vpop.xlane.xlu0 %753
        %v755 = vadd.f32 %v718, %v719
        %756 = vadd.xlane.f32.xlu0 %v755
        %v757 = vpop.xlane.xlu0 %756
        %v758 = vadd.f32 %v720, %v721
        %759 = vadd.xlane.f32.xlu0 %v758
        %v760 = vpop.xlane.xlu0 %759
        %v761 = vadd.f32 %v722, %v723
        %762 = vadd.xlane.f32.xlu0 %v761
        %v763 = vpop.xlane.xlu0 %762
        %v764 = vadd.f32 %v724, %v725
        %765 = vadd.xlane.f32.xlu0 %v764
        %v766 = vpop.xlane.xlu0 %765
        %v767 = vadd.f32 %v726, %v727
        %768 = vadd.xlane.f32.xlu0 %v767
        %v769 = vpop.xlane.xlu0 %768
        %v770 = vadd.f32 %v728, %v729
        %771 = vadd.xlane.f32.xlu0 %v770
        %v772 = vpop.xlane.xlu0 %771
        %v773 = vadd.f32 %v730, %v731
        %774 = vadd.xlane.f32.xlu0 %v773
        %v775 = vpop.xlane.xlu0 %774
        %v776 = vadd.f32 %v732, %v733
        %777 = vadd.xlane.f32.xlu0 %v776
        %v778 = vpop.xlane.xlu0 %777
        %v779 = vadd.f32 %v734, %v735
        %780 = vadd.xlane.f32.xlu0 %v779
        %v781 = vpop.xlane.xlu0 %780
        %v782 = vadd.f32 %v736, %v737
        %783 = vadd.xlane.f32.xlu0 %v782
        %v784 = vpop.xlane.xlu0 %783
        %v785 = vadd.f32 %v738, %v739
        %786 = vadd.xlane.f32.xlu0 %v785
        %v787 = vpop.xlane.xlu0 %786
        %v788 = vsub.f32 %v692, %v742
        %v789 = vsub.f32 %v693, %v745
        %v790 = vsub.f32 %v694, %v748
        %v791 = vsub.f32 %v695, %v751
        %v792 = vsub.f32 %v696, %v754
        %v793 = vsub.f32 %v697, %v757
        %v794 = vsub.f32 %v698, %v760
        %v795 = vsub.f32 %v699, %v763
        %v796 = vsub.f32 %v700, %v766
        %v797 = vsub.f32 %v701, %v769
        %v798 = vsub.f32 %v702, %v772
        %v799 = vsub.f32 %v703, %v775
        %v800 = vsub.f32 %v704, %v778
        %v801 = vsub.f32 %v705, %v781
        %v802 = vsub.f32 %v706, %v784
        %v803 = vsub.f32 %v707, %v787
        %v804 = vsel %vm356, %v788, 0.0
        %v805 = vsel %vm357, %v789, 0.0
        %v806 = vsel %vm358, %v790, 0.0
        %v807 = vsel %vm359, %v791, 0.0
        %v808 = vsel %vm360, %v792, 0.0
        %v809 = vsel %vm361, %v793, 0.0
        %v810 = vsel %vm362, %v794, 0.0
        %v811 = vsel %vm363, %v795, 0.0
        %v812 = vsel %vm364, %v796, 0.0
        %v813 = vsel %vm365, %v797, 0.0
        %v814 = vsel %vm366, %v798, 0.0
        %v815 = vsel %vm367, %v799, 0.0
        %v816 = vsel %vm368, %v800, 0.0
        %v817 = vsel %vm369, %v801, 0.0
        %v818 = vsel %vm370, %v802, 0.0
        %v819 = vsel %vm371, %v803, 0.0
        %vm820 = vcmask 7168
        %v821 = vsel %vm820, %v804, 0.0
        %v822 = vsel %vm820, %v805, 0.0
        %v823 = vadd.f32 %v821, %v822
        %v824 = vsel %vm820, %v806, 0.0
        %v825 = vadd.f32 %v823, %v824
        %v826 = vsel %vm820, %v807, 0.0
        %v827 = vadd.f32 %v825, %v826
        %v828 = vsel %vm820, %v808, 0.0
        %v829 = vadd.f32 %v827, %v828
        %v830 = vsel %vm820, %v809, 0.0
        %v831 = vadd.f32 %v829, %v830
        %v832 = vsel %vm820, %v810, 0.0
        %v833 = vadd.f32 %v831, %v832
        %v834 = vsel %vm820, %v811, 0.0
        %v835 = vadd.f32 %v833, %v834
        %v836 = vsel %vm820, %v812, 0.0
        %v837 = vadd.f32 %v835, %v836
        %v838 = vsel %vm820, %v813, 0.0
        %v839 = vadd.f32 %v837, %v838
        %v840 = vsel %vm820, %v814, 0.0
        %v841 = vadd.f32 %v839, %v840
        %v842 = vsel %vm820, %v815, 0.0
        %v843 = vadd.f32 %v841, %v842
        %v844 = vsel %vm820, %v816, 0.0
        %v845 = vadd.f32 %v843, %v844
        %v846 = vsel %vm820, %v817, 0.0
        %v847 = vadd.f32 %v845, %v846
        %v848 = vsel %vm820, %v818, 0.0
        %v849 = vadd.f32 %v847, %v848
        %v850 = vsel %vm820, %v819, 0.0
        %v851 = vadd.f32 %v849, %v850
        %852 = vadd.xlane.f32.xlu0 %v851
        %v853 = vpop.xlane.xlu0 %852
        %v854 = vrot.slane %v853, 4
        %v855 = vadd.f32 %v853, %v854
        %v856 = vrot.slane %v855, 2
        %v857 = vadd.f32 %v855, %v856
        %v858 = vrot.slane %v857, 1
        %v859 = vadd.f32 %v857, %v858
        %s860 = vtos %v859
        %vm861 = vcmp.eq.f32.partialorder %v286, %v470
        %vm862 = vcmp.eq.f32.partialorder %v287, %v470
        %vm863 = vcmp.eq.f32.partialorder %v288, %v473
        %vm864 = vcmp.eq.f32.partialorder %v289, %v473
        %vm865 = vcmp.eq.f32.partialorder %v290, %v476
        %vm866 = vcmp.eq.f32.partialorder %v291, %v476
        %vm867 = vcmp.eq.f32.partialorder %v292, %v479
        %vm868 = vcmp.eq.f32.partialorder %v293, %v479
        %vm869 = vcmp.eq.f32.partialorder %v294, %v482
        %vm870 = vcmp.eq.f32.partialorder %v295, %v482
        %vm871 = vcmp.eq.f32.partialorder %v296, %v485
        %vm872 = vcmp.eq.f32.partialorder %v297, %v485
        %vm873 = vcmp.eq.f32.partialorder %v298, %v488
        %vm874 = vcmp.eq.f32.partialorder %v299, %v488
        %vm875 = vcmp.eq.f32.partialorder %v300, %v491
        %vm876 = vcmp.eq.f32.partialorder %v301, %v491
        %vm877 = vcmp.eq.f32.partialorder %v302, %v494
        %vm878 = vcmp.eq.f32.partialorder %v303, %v494
        %vm879 = vcmp.eq.f32.partialorder %v304, %v497
        %vm880 = vcmp.eq.f32.partialorder %v305, %v497
        %vm881 = vcmp.eq.f32.partialorder %v306, %v500
        %vm882 = vcmp.eq.f32.partialorder %v307, %v500
        %vm883 = vcmp.eq.f32.partialorder %v308, %v503
        %vm884 = vcmp.eq.f32.partialorder %v309, %v503
        %vm885 = vcmp.eq.f32.partialorder %v310, %v506
        %vm886 = vcmp.eq.f32.partialorder %v311, %v506
        %vm887 = vcmp.eq.f32.partialorder %v312, %v509
        %vm888 = vcmp.eq.f32.partialorder %v313, %v509
        %vm889 = vcmp.eq.f32.partialorder %v314, %v512
        %vm890 = vcmp.eq.f32.partialorder %v315, %v512
        %vm891 = vcmp.eq.f32.partialorder %v316, %v515
        %vm892 = vcmp.eq.f32.partialorder %v317, %v515
        %v893 = vsel %vm861, %v319, 256
        %v894 = vsel %vm862, %v320, 256
        %v895 = vsel %vm863, %v319, 256
        %v896 = vsel %vm864, %v320, 256
        %v897 = vsel %vm865, %v319, 256
        %v898 = vsel %vm866, %v320, 256
        %v899 = vsel %vm867, %v319, 256
        %v900 = vsel %vm868, %v320, 256
        %v901 = vsel %vm869, %v319, 256
        %v902 = vsel %vm870, %v320, 256
        %v903 = vsel %vm871, %v319, 256
        %v904 = vsel %vm872, %v320, 256
        %v905 = vsel %vm873, %v319, 256
        %v906 = vsel %vm874, %v320, 256
        %v907 = vsel %vm875, %v319, 256
        %v908 = vsel %vm876, %v320, 256
        %v909 = vsel %vm877, %v319, 256
        %v910 = vsel %vm878, %v320, 256
        %v911 = vsel %vm879, %v319, 256
        %v912 = vsel %vm880, %v320, 256
        %v913 = vsel %vm881, %v319, 256
        %v914 = vsel %vm882, %v320, 256
        %v915 = vsel %vm883, %v319, 256
        %v916 = vsel %vm884, %v320, 256
        %v917 = vsel %vm885, %v319, 256
        %v918 = vsel %vm886, %v320, 256
        %v919 = vsel %vm887, %v319, 256
        %v920 = vsel %vm888, %v320, 256
        %v921 = vsel %vm889, %v319, 256
        %v922 = vsel %vm890, %v320, 256
        %v923 = vsel %vm891, %v319, 256
        %v924 = vsel %vm892, %v320, 256
        %vm925 = vcmp.lt.s32.totalorder %v893, %v894
        %v926 = vsel %vm925, %v893, %v894
        %v927 = vand.u32 %v926, 65535
        %v928 = vshra.s32 %v926, 16
        %v929 = vcvt.s32.f32 %v927
        %v930 = vcvt.s32.f32 %v928
        %931 = vmin.xlane.f32.xlu0 %v930
        %v932 = vpop.xlane.xlu0 %931
        %vm933 = vcmp.eq.f32.partialorder %v930, %v932
        %v934 = vsel %vm933, %v929, inf
        %935 = vmin.xlane.f32.xlu0 %v934
        %v936 = vpop.xlane.xlu0 %935
        %v937 = vcvt.f32.s32 %v936
        %v938 = vcvt.f32.s32 %v932
        %v939 = vshll.u32 %v938, 16
        %v940 = vadd.s32 %v939, %v937
        %vm941 = vcmp.lt.s32.totalorder %v895, %v896
        %v942 = vsel %vm941, %v895, %v896
        %v943 = vand.u32 %v942, 65535
        %v944 = vshra.s32 %v942, 16
        %v945 = vcvt.s32.f32 %v943
        %v946 = vcvt.s32.f32 %v944
        %947 = vmin.xlane.f32.xlu0 %v946
        %v948 = vpop.xlane.xlu0 %947
        %vm949 = vcmp.eq.f32.partialorder %v946, %v948
        %v950 = vsel %vm949, %v945, inf
        %951 = vmin.xlane.f32.xlu0 %v950
        %v952 = vpop.xlane.xlu0 %951
        %v953 = vcvt.f32.s32 %v952
        %v954 = vcvt.f32.s32 %v948
        %v955 = vshll.u32 %v954, 16
        %v956 = vadd.s32 %v955, %v953
        %vm957 = vcmp.lt.s32.totalorder %v897, %v898
        %v958 = vsel %vm957, %v897, %v898
        %v959 = vand.u32 %v958, 65535
        %v960 = vshra.s32 %v958, 16
        %v961 = vcvt.s32.f32 %v959
        %v962 = vcvt.s32.f32 %v960
        %963 = vmin.xlane.f32.xlu0 %v962
        %v964 = vpop.xlane.xlu0 %963
        %vm965 = vcmp.eq.f32.partialorder %v962, %v964
        %v966 = vsel %vm965, %v961, inf
        %967 = vmin.xlane.f32.xlu0 %v966
        %v968 = vpop.xlane.xlu0 %967
        %v969 = vcvt.f32.s32 %v968
        %v970 = vcvt.f32.s32 %v964
        %v971 = vshll.u32 %v970, 16
        %v972 = vadd.s32 %v971, %v969
        %vm973 = vcmp.lt.s32.totalorder %v899, %v900
        %v974 = vsel %vm973, %v899, %v900
        %v975 = vand.u32 %v974, 65535
        %v976 = vshra.s32 %v974, 16
        %v977 = vcvt.s32.f32 %v975
        %v978 = vcvt.s32.f32 %v976
        %979 = vmin.xlane.f32.xlu0 %v978
        %v980 = vpop.xlane.xlu0 %979
        %vm981 = vcmp.eq.f32.partialorder %v978, %v980
        %v982 = vsel %vm981, %v977, inf
        %983 = vmin.xlane.f32.xlu0 %v982
        %v984 = vpop.xlane.xlu0 %983
        %v985 = vcvt.f32.s32 %v984
        %v986 = vcvt.f32.s32 %v980
        %v987 = vshll.u32 %v986, 16
        %v988 = vadd.s32 %v987, %v985
        %vm989 = vcmp.lt.s32.totalorder %v901, %v902
        %v990 = vsel %vm989, %v901, %v902
        %v991 = vand.u32 %v990, 65535
        %v992 = vshra.s32 %v990, 16
        %v993 = vcvt.s32.f32 %v991
        %v994 = vcvt.s32.f32 %v992
        %995 = vmin.xlane.f32.xlu0 %v994
        %v996 = vpop.xlane.xlu0 %995
        %vm997 = vcmp.eq.f32.partialorder %v994, %v996
        %v998 = vsel %vm997, %v993, inf
        %999 = vmin.xlane.f32.xlu0 %v998
        %v1000 = vpop.xlane.xlu0 %999
        %v1001 = vcvt.f32.s32 %v1000
        %v1002 = vcvt.f32.s32 %v996
        %v1003 = vshll.u32 %v1002, 16
        %v1004 = vadd.s32 %v1003, %v1001
        %vm1005 = vcmp.lt.s32.totalorder %v903, %v904
        %v1006 = vsel %vm1005, %v903, %v904
        %v1007 = vand.u32 %v1006, 65535
        %v1008 = vshra.s32 %v1006, 16
        %v1009 = vcvt.s32.f32 %v1007
        %v1010 = vcvt.s32.f32 %v1008
        %1011 = vmin.xlane.f32.xlu0 %v1010
        %v1012 = vpop.xlane.xlu0 %1011
        %vm1013 = vcmp.eq.f32.partialorder %v1010, %v1012
        %v1014 = vsel %vm1013, %v1009, inf
        %1015 = vmin.xlane.f32.xlu0 %v1014
        %v1016 = vpop.xlane.xlu0 %1015
        %v1017 = vcvt.f32.s32 %v1016
        %v1018 = vcvt.f32.s32 %v1012
        %v1019 = vshll.u32 %v1018, 16
        %v1020 = vadd.s32 %v1019, %v1017
        %vm1021 = vcmp.lt.s32.totalorder %v905, %v906
        %v1022 = vsel %vm1021, %v905, %v906
        %v1023 = vand.u32 %v1022, 65535
        %v1024 = vshra.s32 %v1022, 16
        %v1025 = vcvt.s32.f32 %v1023
        %v1026 = vcvt.s32.f32 %v1024
        %1027 = vmin.xlane.f32.xlu0 %v1026
        %v1028 = vpop.xlane.xlu0 %1027
        %vm1029 = vcmp.eq.f32.partialorder %v1026, %v1028
        %v1030 = vsel %vm1029, %v1025, inf
        %1031 = vmin.xlane.f32.xlu0 %v1030
        %v1032 = vpop.xlane.xlu0 %1031
        %v1033 = vcvt.f32.s32 %v1032
        %v1034 = vcvt.f32.s32 %v1028
        %v1035 = vshll.u32 %v1034, 16
        %v1036 = vadd.s32 %v1035, %v1033
        %vm1037 = vcmp.lt.s32.totalorder %v907, %v908
        %v1038 = vsel %vm1037, %v907, %v908
        %v1039 = vand.u32 %v1038, 65535
        %v1040 = vshra.s32 %v1038, 16
        %v1041 = vcvt.s32.f32 %v1039
        %v1042 = vcvt.s32.f32 %v1040
        %1043 = vmin.xlane.f32.xlu0 %v1042
        %v1044 = vpop.xlane.xlu0 %1043
        %vm1045 = vcmp.eq.f32.partialorder %v1042, %v1044
        %v1046 = vsel %vm1045, %v1041, inf
        %1047 = vmin.xlane.f32.xlu0 %v1046
        %v1048 = vpop.xlane.xlu0 %1047
        %v1049 = vcvt.f32.s32 %v1048
        %v1050 = vcvt.f32.s32 %v1044
        %v1051 = vshll.u32 %v1050, 16
        %v1052 = vadd.s32 %v1051, %v1049
        %vm1053 = vcmp.lt.s32.totalorder %v909, %v910
        %v1054 = vsel %vm1053, %v909, %v910
        %v1055 = vand.u32 %v1054, 65535
        %v1056 = vshra.s32 %v1054, 16
        %v1057 = vcvt.s32.f32 %v1055
        %v1058 = vcvt.s32.f32 %v1056
        %1059 = vmin.xlane.f32.xlu0 %v1058
        %v1060 = vpop.xlane.xlu0 %1059
        %vm1061 = vcmp.eq.f32.partialorder %v1058, %v1060
        %v1062 = vsel %vm1061, %v1057, inf
        %1063 = vmin.xlane.f32.xlu0 %v1062
        %v1064 = vpop.xlane.xlu0 %1063
        %v1065 = vcvt.f32.s32 %v1064
        %v1066 = vcvt.f32.s32 %v1060
        %v1067 = vshll.u32 %v1066, 16
        %v1068 = vadd.s32 %v1067, %v1065
        %vm1069 = vcmp.lt.s32.totalorder %v911, %v912
        %v1070 = vsel %vm1069, %v911, %v912
        %v1071 = vand.u32 %v1070, 65535
        %v1072 = vshra.s32 %v1070, 16
        %v1073 = vcvt.s32.f32 %v1071
        %v1074 = vcvt.s32.f32 %v1072
        %1075 = vmin.xlane.f32.xlu0 %v1074
        %v1076 = vpop.xlane.xlu0 %1075
        %vm1077 = vcmp.eq.f32.partialorder %v1074, %v1076
        %v1078 = vsel %vm1077, %v1073, inf
        %1079 = vmin.xlane.f32.xlu0 %v1078
        %v1080 = vpop.xlane.xlu0 %1079
        %v1081 = vcvt.f32.s32 %v1080
        %v1082 = vcvt.f32.s32 %v1076
        %v1083 = vshll.u32 %v1082, 16
        %v1084 = vadd.s32 %v1083, %v1081
        %vm1085 = vcmp.lt.s32.totalorder %v913, %v914
        %v1086 = vsel %vm1085, %v913, %v914
        %v1087 = vand.u32 %v1086, 65535
        %v1088 = vshra.s32 %v1086, 16
        %v1089 = vcvt.s32.f32 %v1087
        %v1090 = vcvt.s32.f32 %v1088
        %1091 = vmin.xlane.f32.xlu0 %v1090
        %v1092 = vpop.xlane.xlu0 %1091
        %vm1093 = vcmp.eq.f32.partialorder %v1090, %v1092
        %v1094 = vsel %vm1093, %v1089, inf
        %1095 = vmin.xlane.f32.xlu0 %v1094
        %v1096 = vpop.xlane.xlu0 %1095
        %v1097 = vcvt.f32.s32 %v1096
        %v1098 = vcvt.f32.s32 %v1092
        %v1099 = vshll.u32 %v1098, 16
        %v1100 = vadd.s32 %v1099, %v1097
        %vm1101 = vcmp.lt.s32.totalorder %v915, %v916
        %v1102 = vsel %vm1101, %v915, %v916
        %v1103 = vand.u32 %v1102, 65535
        %v1104 = vshra.s32 %v1102, 16
        %v1105 = vcvt.s32.f32 %v1103
        %v1106 = vcvt.s32.f32 %v1104
        %1107 = vmin.xlane.f32.xlu0 %v1106
        %v1108 = vpop.xlane.xlu0 %1107
        %vm1109 = vcmp.eq.f32.partialorder %v1106, %v1108
        %v1110 = vsel %vm1109, %v1105, inf
        %1111 = vmin.xlane.f32.xlu0 %v1110
        %v1112 = vpop.xlane.xlu0 %1111
        %v1113 = vcvt.f32.s32 %v1112
        %v1114 = vcvt.f32.s32 %v1108
        %v1115 = vshll.u32 %v1114, 16
        %v1116 = vadd.s32 %v1115, %v1113
        %vm1117 = vcmp.lt.s32.totalorder %v917, %v918
        %v1118 = vsel %vm1117, %v917, %v918
        %v1119 = vand.u32 %v1118, 65535
        %v1120 = vshra.s32 %v1118, 16
        %v1121 = vcvt.s32.f32 %v1119
        %v1122 = vcvt.s32.f32 %v1120
        %1123 = vmin.xlane.f32.xlu0 %v1122
        %v1124 = vpop.xlane.xlu0 %1123
        %vm1125 = vcmp.eq.f32.partialorder %v1122, %v1124
        %v1126 = vsel %vm1125, %v1121, inf
        %1127 = vmin.xlane.f32.xlu0 %v1126
        %v1128 = vpop.xlane.xlu0 %1127
        %v1129 = vcvt.f32.s32 %v1128
        %v1130 = vcvt.f32.s32 %v1124
        %v1131 = vshll.u32 %v1130, 16
        %v1132 = vadd.s32 %v1131, %v1129
        %vm1133 = vcmp.lt.s32.totalorder %v919, %v920
        %v1134 = vsel %vm1133, %v919, %v920
        %v1135 = vand.u32 %v1134, 65535
        %v1136 = vshra.s32 %v1134, 16
        %v1137 = vcvt.s32.f32 %v1135
        %v1138 = vcvt.s32.f32 %v1136
        %1139 = vmin.xlane.f32.xlu0 %v1138
        %v1140 = vpop.xlane.xlu0 %1139
        %vm1141 = vcmp.eq.f32.partialorder %v1138, %v1140
        %v1142 = vsel %vm1141, %v1137, inf
        %1143 = vmin.xlane.f32.xlu0 %v1142
        %v1144 = vpop.xlane.xlu0 %1143
        %v1145 = vcvt.f32.s32 %v1144
        %v1146 = vcvt.f32.s32 %v1140
        %v1147 = vshll.u32 %v1146, 16
        %v1148 = vadd.s32 %v1147, %v1145
        %vm1149 = vcmp.lt.s32.totalorder %v921, %v922
        %v1150 = vsel %vm1149, %v921, %v922
        %v1151 = vand.u32 %v1150, 65535
        %v1152 = vshra.s32 %v1150, 16
        %v1153 = vcvt.s32.f32 %v1151
        %v1154 = vcvt.s32.f32 %v1152
        %1155 = vmin.xlane.f32.xlu0 %v1154
        %v1156 = vpop.xlane.xlu0 %1155
        %vm1157 = vcmp.eq.f32.partialorder %v1154, %v1156
        %v1158 = vsel %vm1157, %v1153, inf
        %1159 = vmin.xlane.f32.xlu0 %v1158
        %v1160 = vpop.xlane.xlu0 %1159
        %v1161 = vcvt.f32.s32 %v1160
        %v1162 = vcvt.f32.s32 %v1156
        %v1163 = vshll.u32 %v1162, 16
        %v1164 = vadd.s32 %v1163, %v1161
        %vm1165 = vcmp.lt.s32.totalorder %v923, %v924
        %v1166 = vsel %vm1165, %v923, %v924
        %v1167 = vand.u32 %v1166, 65535
        %v1168 = vshra.s32 %v1166, 16
        %v1169 = vcvt.s32.f32 %v1167
        %v1170 = vcvt.s32.f32 %v1168
        %1171 = vmin.xlane.f32.xlu0 %v1170
        %v1172 = vpop.xlane.xlu0 %1171
        %vm1173 = vcmp.eq.f32.partialorder %v1170, %v1172
        %v1174 = vsel %vm1173, %v1169, inf
        %1175 = vmin.xlane.f32.xlu0 %v1174
        %v1176 = vpop.xlane.xlu0 %1175
        %v1177 = vcvt.f32.s32 %v1176
        %v1178 = vcvt.f32.s32 %v1172
        %v1179 = vshll.u32 %v1178, 16
        %v1180 = vadd.s32 %v1179, %v1177
        %vm1181 = vcmp.eq.s32.totalorder %v319, %v940
        %vm1182 = vcmp.eq.s32.totalorder %v320, %v940
        %vm1183 = vcmp.eq.s32.totalorder %v319, %v956
        %vm1184 = vcmp.eq.s32.totalorder %v320, %v956
        %vm1185 = vcmp.eq.s32.totalorder %v319, %v972
        %vm1186 = vcmp.eq.s32.totalorder %v320, %v972
        %vm1187 = vcmp.eq.s32.totalorder %v319, %v988
        %vm1188 = vcmp.eq.s32.totalorder %v320, %v988
        %vm1189 = vcmp.eq.s32.totalorder %v319, %v1004
        %vm1190 = vcmp.eq.s32.totalorder %v320, %v1004
        %vm1191 = vcmp.eq.s32.totalorder %v319, %v1020
        %vm1192 = vcmp.eq.s32.totalorder %v320, %v1020
        %vm1193 = vcmp.eq.s32.totalorder %v319, %v1036
        %vm1194 = vcmp.eq.s32.totalorder %v320, %v1036
        %vm1195 = vcmp.eq.s32.totalorder %v319, %v1052
        %vm1196 = vcmp.eq.s32.totalorder %v320, %v1052
        %vm1197 = vcmp.eq.s32.totalorder %v319, %v1068
        %vm1198 = vcmp.eq.s32.totalorder %v320, %v1068
        %vm1199 = vcmp.eq.s32.totalorder %v319, %v1084
        %vm1200 = vcmp.eq.s32.totalorder %v320, %v1084
        %vm1201 = vcmp.eq.s32.totalorder %v319, %v1100
        %vm1202 = vcmp.eq.s32.totalorder %v320, %v1100
        %vm1203 = vcmp.eq.s32.totalorder %v319, %v1116
        %vm1204 = vcmp.eq.s32.totalorder %v320, %v1116
        %vm1205 = vcmp.eq.s32.totalorder %v319, %v1132
        %vm1206 = vcmp.eq.s32.totalorder %v320, %v1132
        %vm1207 = vcmp.eq.s32.totalorder %v319, %v1148
        %vm1208 = vcmp.eq.s32.totalorder %v320, %v1148
        %vm1209 = vcmp.eq.s32.totalorder %v319, %v1164
        %vm1210 = vcmp.eq.s32.totalorder %v320, %v1164
        %vm1211 = vcmp.eq.s32.totalorder %v319, %v1180
        %vm1212 = vcmp.eq.s32.totalorder %v320, %v1180
        %v1213 = vsel %vm1181, 1, 0
        %v1214 = vsel %vm1182, 1, 0
        %v1215 = vsel %vm1183, 1, 0
        %v1216 = vsel %vm1184, 1, 0
        %v1217 = vsel %vm1185, 1, 0
        %v1218 = vsel %vm1186, 1, 0
        %v1219 = vsel %vm1187, 1, 0
        %v1220 = vsel %vm1188, 1, 0
        %v1221 = vsel %vm1189, 1, 0
        %v1222 = vsel %vm1190, 1, 0
        %v1223 = vsel %vm1191, 1, 0
        %v1224 = vsel %vm1192, 1, 0
        %v1225 = vsel %vm1193, 1, 0
        %v1226 = vsel %vm1194, 1, 0
        %v1227 = vsel %vm1195, 1, 0
        %v1228 = vsel %vm1196, 1, 0
        %v1229 = vsel %vm1197, 1, 0
        %v1230 = vsel %vm1198, 1, 0
        %v1231 = vsel %vm1199, 1, 0
        %v1232 = vsel %vm1200, 1, 0
        %v1233 = vsel %vm1201, 1, 0
        %v1234 = vsel %vm1202, 1, 0
        %v1235 = vsel %vm1203, 1, 0
        %v1236 = vsel %vm1204, 1, 0
        %v1237 = vsel %vm1205, 1, 0
        %v1238 = vsel %vm1206, 1, 0
        %v1239 = vsel %vm1207, 1, 0
        %v1240 = vsel %vm1208, 1, 0
        %v1241 = vsel %vm1209, 1, 0
        %v1242 = vsel %vm1210, 1, 0
        %v1243 = vsel %vm1211, 1, 0
        %v1244 = vsel %vm1212, 1, 0
        %v1245 = vcvt.s32.f32 %v1213
        %v1246 = vcvt.s32.f32 %v1214
        %v1247 = vcvt.s32.f32 %v1215
        %v1248 = vcvt.s32.f32 %v1216
        %v1249 = vcvt.s32.f32 %v1217
        %v1250 = vcvt.s32.f32 %v1218
        %v1251 = vcvt.s32.f32 %v1219
        %v1252 = vcvt.s32.f32 %v1220
        %v1253 = vcvt.s32.f32 %v1221
        %v1254 = vcvt.s32.f32 %v1222
        %v1255 = vcvt.s32.f32 %v1223
        %v1256 = vcvt.s32.f32 %v1224
        %v1257 = vcvt.s32.f32 %v1225
        %v1258 = vcvt.s32.f32 %v1226
        %v1259 = vcvt.s32.f32 %v1227
        %v1260 = vcvt.s32.f32 %v1228
        %v1261 = vcvt.s32.f32 %v1229
        %v1262 = vcvt.s32.f32 %v1230
        %v1263 = vcvt.s32.f32 %v1231
        %v1264 = vcvt.s32.f32 %v1232
        %v1265 = vcvt.s32.f32 %v1233
        %v1266 = vcvt.s32.f32 %v1234
        %v1267 = vcvt.s32.f32 %v1235
        %v1268 = vcvt.s32.f32 %v1236
        %v1269 = vcvt.s32.f32 %v1237
        %v1270 = vcvt.s32.f32 %v1238
        %v1271 = vcvt.s32.f32 %v1239
        %v1272 = vcvt.s32.f32 %v1240
        %v1273 = vcvt.s32.f32 %v1241
        %v1274 = vcvt.s32.f32 %v1242
        %v1275 = vcvt.s32.f32 %v1243
        %v1276 = vcvt.s32.f32 %v1244
        %v1277 = vld [vmem:[%s2] sm:$0xff]
        %v1278 = vld [vmem:[%s2 + $0x8] sm:$0xff]
        %v1279 = vld [vmem:[%s2 + $0x10] sm:$0xff]
        %v1280 = vld [vmem:[%s2 + $0x18] sm:$0xff]
        %v1281 = vld [vmem:[%s2 + $0x20] sm:$0xff]
        %v1282 = vld [vmem:[%s2 + $0x28] sm:$0xff]
        %v1283 = vld [vmem:[%s2 + $0x30] sm:$0xff]
        %v1284 = vld [vmem:[%s2 + $0x38] sm:$0xff]
        %v1285 = vld [vmem:[%s2 + $0x40] sm:$0xff]
        %v1286 = vld [vmem:[%s2 + $0x48] sm:$0xff]
        %v1287 = vld [vmem:[%s2 + $0x50] sm:$0xff]
        %v1288 = vld [vmem:[%s2 + $0x58] sm:$0xff]
        %v1289 = vld [vmem:[%s2 + $0x60] sm:$0xff]
        %v1290 = vld [vmem:[%s2 + $0x68] sm:$0xff]
        %v1291 = vld [vmem:[%s2 + $0x70] sm:$0xff]
        %v1292 = vld [vmem:[%s2 + $0x78] sm:$0xff]
        %v1293 = vld [vmem:[%s2 + $0x80] sm:$0xff]
        %v1294 = vld [vmem:[%s2 + $0x88] sm:$0xff]
        %v1295 = vld [vmem:[%s2 + $0x90] sm:$0xff]
        %v1296 = vld [vmem:[%s2 + $0x98] sm:$0xff]
        %v1297 = vld [vmem:[%s2 + $0xa0] sm:$0xff]
        %v1298 = vld [vmem:[%s2 + $0xa8] sm:$0xff]
        %v1299 = vld [vmem:[%s2 + $0xb0] sm:$0xff]
        %v1300 = vld [vmem:[%s2 + $0xb8] sm:$0xff]
        %v1301 = vld [vmem:[%s2 + $0xc0] sm:$0xff]
        %v1302 = vld [vmem:[%s2 + $0xc8] sm:$0xff]
        %v1303 = vld [vmem:[%s2 + $0xd0] sm:$0xff]
        %v1304 = vld [vmem:[%s2 + $0xd8] sm:$0xff]
        %v1305 = vld [vmem:[%s2 + $0xe0] sm:$0xff]
        %v1306 = vld [vmem:[%s2 + $0xe8] sm:$0xff]
        %v1307 = vld [vmem:[%s2 + $0xf0] sm:$0xff]
        %v1308 = vld [vmem:[%s2 + $0xf8] sm:$0xff]
        %1309 = vmatpush.msra.mxu0 %v1292
        %1310 = vmatpush.msra.mxu0 %v1291
        %1311 = vmatpush.msra.mxu0 %v1290
        %1312 = vmatpush.msra.mxu0 %v1289
        %1313 = vmatpush.msra.mxu0 %v1288
        %1314 = vmatpush.msra.mxu0 %v1287
        %1315 = vmatpush.msra.mxu0 %v1286
        %1316 = vmatpush.msra.mxu0 %v1285
        %1317 = vmatpush.msra.mxu0 %v1284
        %1318 = vmatpush.msra.mxu0 %v1283
        %1319 = vmatpush.msra.mxu0 %v1282
        %1320 = vmatpush.msra.mxu0 %v1281
        %1321 = vmatpush.msra.mxu0 %v1280
        %1322 = vmatpush.msra.mxu0 %v1279
        %1323 = vmatpush.msra.mxu0 %v1278
        %1324 = vmatpush.msra.mxu0 %v1277
        %1325 = vmatmul.f32.gmra.mxu0 %v1245
        %v1326 = vpop.f32.mrf.mxu0
        %v1327 = vadd.f32 0.0, %v1326
        %1328 = vmatmul.f32.gmra.mxu0 %v1247
        %v1329 = vpop.f32.mrf.mxu0
        %v1330 = vadd.f32 0.0, %v1329
        %1331 = vmatmul.f32.gmra.mxu0 %v1249
        %v1332 = vpop.f32.mrf.mxu0
        %v1333 = vadd.f32 0.0, %v1332
        %1334 = vmatmul.f32.gmra.mxu0 %v1251
        %v1335 = vpop.f32.mrf.mxu0
        %v1336 = vadd.f32 0.0, %v1335
        %1337 = vmatmul.f32.gmra.mxu0 %v1253
        %v1338 = vpop.f32.mrf.mxu0
        %v1339 = vadd.f32 0.0, %v1338
        %1340 = vmatmul.f32.gmra.mxu0 %v1255
        %v1341 = vpop.f32.mrf.mxu0
        %v1342 = vadd.f32 0.0, %v1341
        %1343 = vmatmul.f32.gmra.mxu0 %v1257
        %v1344 = vpop.f32.mrf.mxu0
        %v1345 = vadd.f32 0.0, %v1344
        %1346 = vmatmul.f32.gmra.mxu0 %v1259
        %v1347 = vpop.f32.mrf.mxu0
        %v1348 = vadd.f32 0.0, %v1347
        %1349 = vmatmul.f32.gmra.mxu0 %v1261
        %v1350 = vpop.f32.mrf.mxu0
        %v1351 = vadd.f32 0.0, %v1350
        %1352 = vmatmul.f32.gmra.mxu0 %v1263
        %v1353 = vpop.f32.mrf.mxu0
        %v1354 = vadd.f32 0.0, %v1353
        %1355 = vmatmul.f32.gmra.mxu0 %v1265
        %v1356 = vpop.f32.mrf.mxu0
        %v1357 = vadd.f32 0.0, %v1356
        %1358 = vmatmul.f32.gmra.mxu0 %v1267
        %v1359 = vpop.f32.mrf.mxu0
        %v1360 = vadd.f32 0.0, %v1359
        %1361 = vmatmul.f32.gmra.mxu0 %v1269
        %v1362 = vpop.f32.mrf.mxu0
        %v1363 = vadd.f32 0.0, %v1362
        %1364 = vmatmul.f32.gmra.mxu0 %v1271
        %v1365 = vpop.f32.mrf.mxu0
        %v1366 = vadd.f32 0.0, %v1365
        %1367 = vmatmul.f32.gmra.mxu0 %v1273
        %v1368 = vpop.f32.mrf.mxu0
        %v1369 = vadd.f32 0.0, %v1368
        %1370 = vmatmul.f32.gmra.mxu0 %v1275
        %v1371 = vpop.f32.mrf.mxu0
        %v1372 = vadd.f32 0.0, %v1371
        %1373 = vdwg.mxu0
        %1374 = vmatpush.msra.mxu0 %v1308
        %1375 = vmatpush.msra.mxu0 %v1307
        %1376 = vmatpush.msra.mxu0 %v1306
        %1377 = vmatpush.msra.mxu0 %v1305
        %1378 = vmatpush.msra.mxu0 %v1304
        %1379 = vmatpush.msra.mxu0 %v1303
        %1380 = vmatpush.msra.mxu0 %v1302
        %1381 = vmatpush.msra.mxu0 %v1301
        %1382 = vmatpush.msra.mxu0 %v1300
        %1383 = vmatpush.msra.mxu0 %v1299
        %1384 = vmatpush.msra.mxu0 %v1298
        %1385 = vmatpush.msra.mxu0 %v1297
        %1386 = vmatpush.msra.mxu0 %v1296
        %1387 = vmatpush.msra.mxu0 %v1295
        %1388 = vmatpush.msra.mxu0 %v1294
        %1389 = vmatpush.msra.mxu0 %v1293
        %1390 = vmatmul.f32.gmra.mxu0 %v1246
        %v1391 = vpop.f32.mrf.mxu0
        %v1392 = vadd.f32 %v1327, %v1391
        %1393 = vmatmul.f32.gmra.mxu0 %v1248
        %v1394 = vpop.f32.mrf.mxu0
        %v1395 = vadd.f32 %v1330, %v1394
        %1396 = vmatmul.f32.gmra.mxu0 %v1250
        %v1397 = vpop.f32.mrf.mxu0
        %v1398 = vadd.f32 %v1333, %v1397
        %1399 = vmatmul.f32.gmra.mxu0 %v1252
        %v1400 = vpop.f32.mrf.mxu0
        %v1401 = vadd.f32 %v1336, %v1400
        %1402 = vmatmul.f32.gmra.mxu0 %v1254
        %v1403 = vpop.f32.mrf.mxu0
        %v1404 = vadd.f32 %v1339, %v1403
        %1405 = vmatmul.f32.gmra.mxu0 %v1256
        %v1406 = vpop.f32.mrf.mxu0
        %v1407 = vadd.f32 %v1342, %v1406
        %1408 = vmatmul.f32.gmra.mxu0 %v1258
        %v1409 = vpop.f32.mrf.mxu0
        %v1410 = vadd.f32 %v1345, %v1409
        %1411 = vmatmul.f32.gmra.mxu0 %v1260
        %v1412 = vpop.f32.mrf.mxu0
        %v1413 = vadd.f32 %v1348, %v1412
        %1414 = vmatmul.f32.gmra.mxu0 %v1262
        %v1415 = vpop.f32.mrf.mxu0
        %v1416 = vadd.f32 %v1351, %v1415
        %1417 = vmatmul.f32.gmra.mxu0 %v1264
        %v1418 = vpop.f32.mrf.mxu0
        %v1419 = vadd.f32 %v1354, %v1418
        %1420 = vmatmul.f32.gmra.mxu0 %v1266
        %v1421 = vpop.f32.mrf.mxu0
        %v1422 = vadd.f32 %v1357, %v1421
        %1423 = vmatmul.f32.gmra.mxu0 %v1268
        %v1424 = vpop.f32.mrf.mxu0
        %v1425 = vadd.f32 %v1360, %v1424
        %1426 = vmatmul.f32.gmra.mxu0 %v1270
        %v1427 = vpop.f32.mrf.mxu0
        %v1428 = vadd.f32 %v1363, %v1427
        %1429 = vmatmul.f32.gmra.mxu0 %v1272
        %v1430 = vpop.f32.mrf.mxu0
        %v1431 = vadd.f32 %v1366, %v1430
        %1432 = vmatmul.f32.gmra.mxu0 %v1274
        %v1433 = vpop.f32.mrf.mxu0
        %v1434 = vadd.f32 %v1369, %v1433
        %1435 = vmatmul.f32.gmra.mxu0 %v1276
        %v1436 = vpop.f32.mrf.mxu0
        %v1437 = vadd.f32 %v1372, %v1436
        %1438 = vdwg.mxu0
        %v1439 = vsel %vm436, 1, 0
        %v1440 = vsel %vm437, 1, 0
        %v1441 = vsel %vm438, 1, 0
        %v1442 = vsel %vm439, 1, 0
        %v1443 = vsel %vm440, 1, 0
        %v1444 = vsel %vm441, 1, 0
        %v1445 = vsel %vm442, 1, 0
        %v1446 = vsel %vm443, 1, 0
        %v1447 = vsel %vm444, 1, 0
        %v1448 = vsel %vm445, 1, 0
        %v1449 = vsel %vm446, 1, 0
        %v1450 = vsel %vm447, 1, 0
        %v1451 = vsel %vm448, 1, 0
        %v1452 = vsel %vm449, 1, 0
        %v1453 = vsel %vm450, 1, 0
        %v1454 = vsel %vm451, 1, 0
        %v1455 = vsel %vm452, 1, 0
        %v1456 = vsel %vm453, 1, 0
        %v1457 = vsel %vm454, 1, 0
        %v1458 = vsel %vm455, 1, 0
        %v1459 = vsel %vm456, 1, 0
        %v1460 = vsel %vm457, 1, 0
        %v1461 = vsel %vm458, 1, 0
        %v1462 = vsel %vm459, 1, 0
        %v1463 = vsel %vm460, 1, 0
        %v1464 = vsel %vm461, 1, 0
        %v1465 = vsel %vm462, 1, 0
        %v1466 = vsel %vm463, 1, 0
        %v1467 = vsel %vm464, 1, 0
        %v1468 = vsel %vm465, 1, 0
        %v1469 = vsel %vm466, 1, 0
        %v1470 = vsel %vm467, 1, 0
        %v1471 = vcvt.s32.f32 %v1439
        %v1472 = vcvt.s32.f32 %v1440
        %v1473 = vcvt.s32.f32 %v1441
        %v1474 = vcvt.s32.f32 %v1442
        %v1475 = vcvt.s32.f32 %v1443
        %v1476 = vcvt.s32.f32 %v1444
        %v1477 = vcvt.s32.f32 %v1445
        %v1478 = vcvt.s32.f32 %v1446
        %v1479 = vcvt.s32.f32 %v1447
        %v1480 = vcvt.s32.f32 %v1448
        %v1481 = vcvt.s32.f32 %v1449
        %v1482 = vcvt.s32.f32 %v1450
        %v1483 = vcvt.s32.f32 %v1451
        %v1484 = vcvt.s32.f32 %v1452
        %v1485 = vcvt.s32.f32 %v1453
        %v1486 = vcvt.s32.f32 %v1454
        %v1487 = vcvt.s32.f32 %v1455
        %v1488 = vcvt.s32.f32 %v1456
        %v1489 = vcvt.s32.f32 %v1457
        %v1490 = vcvt.s32.f32 %v1458
        %v1491 = vcvt.s32.f32 %v1459
        %v1492 = vcvt.s32.f32 %v1460
        %v1493 = vcvt.s32.f32 %v1461
        %v1494 = vcvt.s32.f32 %v1462
        %v1495 = vcvt.s32.f32 %v1463
        %v1496 = vcvt.s32.f32 %v1464
        %v1497 = vcvt.s32.f32 %v1465
        %v1498 = vcvt.s32.f32 %v1466
        %v1499 = vcvt.s32.f32 %v1467
        %v1500 = vcvt.s32.f32 %v1468
        %v1501 = vcvt.s32.f32 %v1469
        %v1502 = vcvt.s32.f32 %v1470
        %1503 = vmatpush.msra.mxu0 %v1292
        %1504 = vmatpush.msra.mxu0 %v1291
        %1505 = vmatpush.msra.mxu0 %v1290
        %1506 = vmatpush.msra.mxu0 %v1289
        %1507 = vmatpush.msra.mxu0 %v1288
        %1508 = vmatpush.msra.mxu0 %v1287
        %1509 = vmatpush.msra.mxu0 %v1286
        %1510 = vmatpush.msra.mxu0 %v1285
        %1511 = vmatpush.msra.mxu0 %v1284
        %1512 = vmatpush.msra.mxu0 %v1283
        %1513 = vmatpush.msra.mxu0 %v1282
        %1514 = vmatpush.msra.mxu0 %v1281
        %1515 = vmatpush.msra.mxu0 %v1280
        %1516 = vmatpush.msra.mxu0 %v1279
        %1517 = vmatpush.msra.mxu0 %v1278
        %1518 = vmatpush.msra.mxu0 %v1277
        %1519 = vmatmul.f32.gmra.mxu0 %v1471
        %v1520 = vpop.f32.mrf.mxu0
        %v1521 = vadd.f32 0.0, %v1520
        %1522 = vmatmul.f32.gmra.mxu0 %v1473
        %v1523 = vpop.f32.mrf.mxu0
        %v1524 = vadd.f32 0.0, %v1523
        %1525 = vmatmul.f32.gmra.mxu0 %v1475
        %v1526 = vpop.f32.mrf.mxu0
        %v1527 = vadd.f32 0.0, %v1526
        %1528 = vmatmul.f32.gmra.mxu0 %v1477
        %v1529 = vpop.f32.mrf.mxu0
        %v1530 = vadd.f32 0.0, %v1529
        %1531 = vmatmul.f32.gmra.mxu0 %v1479
        %v1532 = vpop.f32.mrf.mxu0
        %v1533 = vadd.f32 0.0, %v1532
        %1534 = vmatmul.f32.gmra.mxu0 %v1481
        %v1535 = vpop.f32.mrf.mxu0
        %v1536 = vadd.f32 0.0, %v1535
        %1537 = vmatmul.f32.gmra.mxu0 %v1483
        %v1538 = vpop.f32.mrf.mxu0
        %v1539 = vadd.f32 0.0, %v1538
        %1540 = vmatmul.f32.gmra.mxu0 %v1485
        %v1541 = vpop.f32.mrf.mxu0
        %v1542 = vadd.f32 0.0, %v1541
        %1543 = vmatmul.f32.gmra.mxu0 %v1487
        %v1544 = vpop.f32.mrf.mxu0
        %v1545 = vadd.f32 0.0, %v1544
        %1546 = vmatmul.f32.gmra.mxu0 %v1489
        %v1547 = vpop.f32.mrf.mxu0
        %v1548 = vadd.f32 0.0, %v1547
        %1549 = vmatmul.f32.gmra.mxu0 %v1491
        %v1550 = vpop.f32.mrf.mxu0
        %v1551 = vadd.f32 0.0, %v1550
        %1552 = vmatmul.f32.gmra.mxu0 %v1493
        %v1553 = vpop.f32.mrf.mxu0
        %v1554 = vadd.f32 0.0, %v1553
        %1555 = vmatmul.f32.gmra.mxu0 %v1495
        %v1556 = vpop.f32.mrf.mxu0
        %v1557 = vadd.f32 0.0, %v1556
        %1558 = vmatmul.f32.gmra.mxu0 %v1497
        %v1559 = vpop.f32.mrf.mxu0
        %v1560 = vadd.f32 0.0, %v1559
        %1561 = vmatmul.f32.gmra.mxu0 %v1499
        %v1562 = vpop.f32.mrf.mxu0
        %v1563 = vadd.f32 0.0, %v1562
        %1564 = vmatmul.f32.gmra.mxu0 %v1501
        %v1565 = vpop.f32.mrf.mxu0
        %v1566 = vadd.f32 0.0, %v1565
        %1567 = vdwg.mxu0
        %1568 = vmatpush.msra.mxu0 %v1308
        %1569 = vmatpush.msra.mxu0 %v1307
        %1570 = vmatpush.msra.mxu0 %v1306
        %1571 = vmatpush.msra.mxu0 %v1305
        %1572 = vmatpush.msra.mxu0 %v1304
        %1573 = vmatpush.msra.mxu0 %v1303
        %1574 = vmatpush.msra.mxu0 %v1302
        %1575 = vmatpush.msra.mxu0 %v1301
        %1576 = vmatpush.msra.mxu0 %v1300
        %1577 = vmatpush.msra.mxu0 %v1299
        %1578 = vmatpush.msra.mxu0 %v1298
        %1579 = vmatpush.msra.mxu0 %v1297
        %1580 = vmatpush.msra.mxu0 %v1296
        %1581 = vmatpush.msra.mxu0 %v1295
        %1582 = vmatpush.msra.mxu0 %v1294
        %1583 = vmatpush.msra.mxu0 %v1293
        %1584 = vmatmul.f32.gmra.mxu0 %v1472
        %v1585 = vpop.f32.mrf.mxu0
        %v1586 = vadd.f32 %v1521, %v1585
        %1587 = vmatmul.f32.gmra.mxu0 %v1474
        %v1588 = vpop.f32.mrf.mxu0
        %v1589 = vadd.f32 %v1524, %v1588
        %1590 = vmatmul.f32.gmra.mxu0 %v1476
        %v1591 = vpop.f32.mrf.mxu0
        %v1592 = vadd.f32 %v1527, %v1591
        %1593 = vmatmul.f32.gmra.mxu0 %v1478
        %v1594 = vpop.f32.mrf.mxu0
        %v1595 = vadd.f32 %v1530, %v1594
        %1596 = vmatmul.f32.gmra.mxu0 %v1480
        %v1597 = vpop.f32.mrf.mxu0
        %v1598 = vadd.f32 %v1533, %v1597
        %1599 = vmatmul.f32.gmra.mxu0 %v1482
        %v1600 = vpop.f32.mrf.mxu0
        %v1601 = vadd.f32 %v1536, %v1600
        %1602 = vmatmul.f32.gmra.mxu0 %v1484
        %v1603 = vpop.f32.mrf.mxu0
        %v1604 = vadd.f32 %v1539, %v1603
        %1605 = vmatmul.f32.gmra.mxu0 %v1486
        %v1606 = vpop.f32.mrf.mxu0
        %v1607 = vadd.f32 %v1542, %v1606
        %1608 = vmatmul.f32.gmra.mxu0 %v1488
        %v1609 = vpop.f32.mrf.mxu0
        %v1610 = vadd.f32 %v1545, %v1609
        %1611 = vmatmul.f32.gmra.mxu0 %v1490
        %v1612 = vpop.f32.mrf.mxu0
        %v1613 = vadd.f32 %v1548, %v1612
        %1614 = vmatmul.f32.gmra.mxu0 %v1492
        %v1615 = vpop.f32.mrf.mxu0
        %v1616 = vadd.f32 %v1551, %v1615
        %1617 = vmatmul.f32.gmra.mxu0 %v1494
        %v1618 = vpop.f32.mrf.mxu0
        %v1619 = vadd.f32 %v1554, %v1618
        %1620 = vmatmul.f32.gmra.mxu0 %v1496
        %v1621 = vpop.f32.mrf.mxu0
        %v1622 = vadd.f32 %v1557, %v1621
        %1623 = vmatmul.f32.gmra.mxu0 %v1498
        %v1624 = vpop.f32.mrf.mxu0
        %v1625 = vadd.f32 %v1560, %v1624
        %1626 = vmatmul.f32.gmra.mxu0 %v1500
        %v1627 = vpop.f32.mrf.mxu0
        %v1628 = vadd.f32 %v1563, %v1627
        %1629 = vmatmul.f32.gmra.mxu0 %v1502
        %v1630 = vpop.f32.mrf.mxu0
        %v1631 = vadd.f32 %v1566, %v1630
        %1632 = vdwg.mxu0
        %1649 = vrot.lane.b32.xlu0 %v1392, 127
        %v1650 = vpop.permute.xlu0 %1649
        %1651 = vrot.lane.b32.xlu0 %v1395, 127
        %v1652 = vpop.permute.xlu0 %1651
        %1653 = vrot.lane.b32.xlu0 %v1398, 127
        %v1654 = vpop.permute.xlu0 %1653
        %1655 = vrot.lane.b32.xlu0 %v1401, 127
        %v1656 = vpop.permute.xlu0 %1655
        %1657 = vrot.lane.b32.xlu0 %v1404, 127
        %v1658 = vpop.permute.xlu0 %1657
        %1659 = vrot.lane.b32.xlu0 %v1407, 127
        %v1660 = vpop.permute.xlu0 %1659
        %1661 = vrot.lane.b32.xlu0 %v1410, 127
        %v1662 = vpop.permute.xlu0 %1661
        %1663 = vrot.lane.b32.xlu0 %v1413, 127
        %v1664 = vpop.permute.xlu0 %1663
        %1665 = vrot.lane.b32.xlu0 %v1416, 127
        %v1666 = vpop.permute.xlu0 %1665
        %1667 = vrot.lane.b32.xlu0 %v1419, 127
        %v1668 = vpop.permute.xlu0 %1667
        %1669 = vrot.lane.b32.xlu0 %v1422, 127
        %v1670 = vpop.permute.xlu0 %1669
        %1671 = vrot.lane.b32.xlu0 %v1425, 127
        %v1672 = vpop.permute.xlu0 %1671
        %1673 = vrot.lane.b32.xlu0 %v1428, 127
        %v1674 = vpop.permute.xlu0 %1673
        %1675 = vrot.lane.b32.xlu0 %v1431, 127
        %v1676 = vpop.permute.xlu0 %1675
        %1677 = vrot.lane.b32.xlu0 %v1434, 127
        %v1678 = vpop.permute.xlu0 %1677
        %1679 = vrot.lane.b32.xlu0 %v1437, 127
        %v1680 = vpop.permute.xlu0 %1679
        %v1697 = vmul.f32 %v1586, %v1650
        %v1698 = vmul.f32 %v1589, %v1652
        %v1699 = vmul.f32 %v1592, %v1654
        %v1700 = vmul.f32 %v1595, %v1656
        %v1701 = vmul.f32 %v1598, %v1658
        %v1702 = vmul.f32 %v1601, %v1660
        %v1703 = vmul.f32 %v1604, %v1662
        %v1704 = vmul.f32 %v1607, %v1664
        %v1705 = vmul.f32 %v1610, %v1666
        %v1706 = vmul.f32 %v1613, %v1668
        %v1707 = vmul.f32 %v1616, %v1670
        %v1708 = vmul.f32 %v1619, %v1672
        %v1709 = vmul.f32 %v1622, %v1674
        %v1710 = vmul.f32 %v1625, %v1676
        %v1711 = vmul.f32 %v1628, %v1678
        %v1712 = vmul.f32 %v1631, %v1680
        %1713 = vrot.lane.b32.xlu0 %v1392, 1
        %v1714 = vpop.permute.xlu0 %1713
        %1715 = vrot.lane.b32.xlu0 %v1395, 1
        %v1716 = vpop.permute.xlu0 %1715
        %1717 = vrot.lane.b32.xlu0 %v1398, 1
        %v1718 = vpop.permute.xlu0 %1717
        %1719 = vrot.lane.b32.xlu0 %v1401, 1
        %v1720 = vpop.permute.xlu0 %1719
        %1721 = vrot.lane.b32.xlu0 %v1404, 1
        %v1722 = vpop.permute.xlu0 %1721
        %1723 = vrot.lane.b32.xlu0 %v1407, 1
        %v1724 = vpop.permute.xlu0 %1723
        %1725 = vrot.lane.b32.xlu0 %v1410, 1
        %v1726 = vpop.permute.xlu0 %1725
        %1727 = vrot.lane.b32.xlu0 %v1413, 1
        %v1728 = vpop.permute.xlu0 %1727
        %1729 = vrot.lane.b32.xlu0 %v1416, 1
        %v1730 = vpop.permute.xlu0 %1729
        %1731 = vrot.lane.b32.xlu0 %v1419, 1
        %v1732 = vpop.permute.xlu0 %1731
        %1733 = vrot.lane.b32.xlu0 %v1422, 1
        %v1734 = vpop.permute.xlu0 %1733
        %1735 = vrot.lane.b32.xlu0 %v1425, 1
        %v1736 = vpop.permute.xlu0 %1735
        %1737 = vrot.lane.b32.xlu0 %v1428, 1
        %v1738 = vpop.permute.xlu0 %1737
        %1739 = vrot.lane.b32.xlu0 %v1431, 1
        %v1740 = vpop.permute.xlu0 %1739
        %1741 = vrot.lane.b32.xlu0 %v1434, 1
        %v1742 = vpop.permute.xlu0 %1741
        %1743 = vrot.lane.b32.xlu0 %v1437, 1
        %v1744 = vpop.permute.xlu0 %1743
        %v1761 = vmul.f32 %v1586, %v1714
        %v1762 = vmul.f32 %v1589, %v1716
        %v1763 = vmul.f32 %v1592, %v1718
        %v1764 = vmul.f32 %v1595, %v1720
        %v1765 = vmul.f32 %v1598, %v1722
        %v1766 = vmul.f32 %v1601, %v1724
        %v1767 = vmul.f32 %v1604, %v1726
        %v1768 = vmul.f32 %v1607, %v1728
        %v1769 = vmul.f32 %v1610, %v1730
        %v1770 = vmul.f32 %v1613, %v1732
        %v1771 = vmul.f32 %v1616, %v1734
        %v1772 = vmul.f32 %v1619, %v1736
        %v1773 = vmul.f32 %v1622, %v1738
        %v1774 = vmul.f32 %v1625, %v1740
        %v1775 = vmul.f32 %v1628, %v1742
        %v1776 = vmul.f32 %v1631, %v1744
        %1793 = vrot.lane.b32.xlu0 %v1761, 127
        %v1794 = vpop.permute.xlu0 %1793
        %1795 = vrot.lane.b32.xlu0 %v1762, 127
        %v1796 = vpop.permute.xlu0 %1795
        %1797 = vrot.lane.b32.xlu0 %v1763, 127
        %v1798 = vpop.permute.xlu0 %1797
        %1799 = vrot.lane.b32.xlu0 %v1764, 127
        %v1800 = vpop.permute.xlu0 %1799
        %1801 = vrot.lane.b32.xlu0 %v1765, 127
        %v1802 = vpop.permute.xlu0 %1801
        %1803 = vrot.lane.b32.xlu0 %v1766, 127
        %v1804 = vpop.permute.xlu0 %1803
        %1805 = vrot.lane.b32.xlu0 %v1767, 127
        %v1806 = vpop.permute.xlu0 %1805
        %1807 = vrot.lane.b32.xlu0 %v1768, 127
        %v1808 = vpop.permute.xlu0 %1807
        %1809 = vrot.lane.b32.xlu0 %v1769, 127
        %v1810 = vpop.permute.xlu0 %1809
        %1811 = vrot.lane.b32.xlu0 %v1770, 127
        %v1812 = vpop.permute.xlu0 %1811
        %1813 = vrot.lane.b32.xlu0 %v1771, 127
        %v1814 = vpop.permute.xlu0 %1813
        %1815 = vrot.lane.b32.xlu0 %v1772, 127
        %v1816 = vpop.permute.xlu0 %1815
        %1817 = vrot.lane.b32.xlu0 %v1773, 127
        %v1818 = vpop.permute.xlu0 %1817
        %1819 = vrot.lane.b32.xlu0 %v1774, 127
        %v1820 = vpop.permute.xlu0 %1819
        %1821 = vrot.lane.b32.xlu0 %v1775, 127
        %v1822 = vpop.permute.xlu0 %1821
        %1823 = vrot.lane.b32.xlu0 %v1776, 127
        %v1824 = vpop.permute.xlu0 %1823
        %v1841 = vsub.f32 %v1697, %v1794
        %v1842 = vsub.f32 %v1698, %v1796
        %v1843 = vsub.f32 %v1699, %v1798
        %v1844 = vsub.f32 %v1700, %v1800
        %v1845 = vsub.f32 %v1701, %v1802
        %v1846 = vsub.f32 %v1702, %v1804
        %v1847 = vsub.f32 %v1703, %v1806
        %v1848 = vsub.f32 %v1704, %v1808
        %v1849 = vsub.f32 %v1705, %v1810
        %v1850 = vsub.f32 %v1706, %v1812
        %v1851 = vsub.f32 %v1707, %v1814
        %v1852 = vsub.f32 %v1708, %v1816
        %v1853 = vsub.f32 %v1709, %v1818
        %v1854 = vsub.f32 %v1710, %v1820
        %v1855 = vsub.f32 %v1711, %v1822
        %v1856 = vsub.f32 %v1712, %v1824
        %v1857 = vmul.f32 %v1841, %v1841
        %v1858 = vmul.f32 %v1842, %v1842
        %v1859 = vmul.f32 %v1843, %v1843
        %v1860 = vmul.f32 %v1844, %v1844
        %v1861 = vmul.f32 %v1845, %v1845
        %v1862 = vmul.f32 %v1846, %v1846
        %v1863 = vmul.f32 %v1847, %v1847
        %v1864 = vmul.f32 %v1848, %v1848
        %v1865 = vmul.f32 %v1849, %v1849
        %v1866 = vmul.f32 %v1850, %v1850
        %v1867 = vmul.f32 %v1851, %v1851
        %v1868 = vmul.f32 %v1852, %v1852
        %v1869 = vmul.f32 %v1853, %v1853
        %v1870 = vmul.f32 %v1854, %v1854
        %v1871 = vmul.f32 %v1855, %v1855
        %v1872 = vmul.f32 %v1856, %v1856
        %v1873 = vmul.f32 %v1392, %v1586
        %v1874 = vmul.f32 %v1395, %v1589
        %v1875 = vmul.f32 %v1398, %v1592
        %v1876 = vmul.f32 %v1401, %v1595
        %v1877 = vmul.f32 %v1404, %v1598
        %v1878 = vmul.f32 %v1407, %v1601
        %v1879 = vmul.f32 %v1410, %v1604
        %v1880 = vmul.f32 %v1413, %v1607
        %v1881 = vmul.f32 %v1416, %v1610
        %v1882 = vmul.f32 %v1419, %v1613
        %v1883 = vmul.f32 %v1422, %v1616
        %v1884 = vmul.f32 %v1425, %v1619
        %v1885 = vmul.f32 %v1428, %v1622
        %v1886 = vmul.f32 %v1431, %v1625
        %v1887 = vmul.f32 %v1434, %v1628
        %v1888 = vmul.f32 %v1437, %v1631
        %1905 = vrot.lane.b32.xlu0 %v1841, 2
        %v1906 = vpop.permute.xlu0 %1905
        %1907 = vrot.lane.b32.xlu0 %v1842, 2
        %v1908 = vpop.permute.xlu0 %1907
        %1909 = vrot.lane.b32.xlu0 %v1843, 2
        %v1910 = vpop.permute.xlu0 %1909
        %1911 = vrot.lane.b32.xlu0 %v1844, 2
        %v1912 = vpop.permute.xlu0 %1911
        %1913 = vrot.lane.b32.xlu0 %v1845, 2
        %v1914 = vpop.permute.xlu0 %1913
        %1915 = vrot.lane.b32.xlu0 %v1846, 2
        %v1916 = vpop.permute.xlu0 %1915
        %1917 = vrot.lane.b32.xlu0 %v1847, 2
        %v1918 = vpop.permute.xlu0 %1917
        %1919 = vrot.lane.b32.xlu0 %v1848, 2
        %v1920 = vpop.permute.xlu0 %1919
        %1921 = vrot.lane.b32.xlu0 %v1849, 2
        %v1922 = vpop.permute.xlu0 %1921
        %1923 = vrot.lane.b32.xlu0 %v1850, 2
        %v1924 = vpop.permute.xlu0 %1923
        %1925 = vrot.lane.b32.xlu0 %v1851, 2
        %v1926 = vpop.permute.xlu0 %1925
        %1927 = vrot.lane.b32.xlu0 %v1852, 2
        %v1928 = vpop.permute.xlu0 %1927
        %1929 = vrot.lane.b32.xlu0 %v1853, 2
        %v1930 = vpop.permute.xlu0 %1929
        %1931 = vrot.lane.b32.xlu0 %v1854, 2
        %v1932 = vpop.permute.xlu0 %1931
        %1933 = vrot.lane.b32.xlu0 %v1855, 2
        %v1934 = vpop.permute.xlu0 %1933
        %1935 = vrot.lane.b32.xlu0 %v1856, 2
        %v1936 = vpop.permute.xlu0 %1935
        %v1953 = vmul.f32 %v1873, %v1906
        %v1954 = vmul.f32 %v1874, %v1908
        %v1955 = vmul.f32 %v1875, %v1910
        %v1956 = vmul.f32 %v1876, %v1912
        %v1957 = vmul.f32 %v1877, %v1914
        %v1958 = vmul.f32 %v1878, %v1916
        %v1959 = vmul.f32 %v1879, %v1918
        %v1960 = vmul.f32 %v1880, %v1920
        %v1961 = vmul.f32 %v1881, %v1922
        %v1962 = vmul.f32 %v1882, %v1924
        %v1963 = vmul.f32 %v1883, %v1926
        %v1964 = vmul.f32 %v1884, %v1928
        %v1965 = vmul.f32 %v1885, %v1930
        %v1966 = vmul.f32 %v1886, %v1932
        %v1967 = vmul.f32 %v1887, %v1934
        %v1968 = vmul.f32 %v1888, %v1936
        %v1969 = vmul.f32 %v1953, %v1906
        %v1970 = vmul.f32 %v1954, %v1908
        %v1971 = vmul.f32 %v1955, %v1910
        %v1972 = vmul.f32 %v1956, %v1912
        %v1973 = vmul.f32 %v1957, %v1914
        %v1974 = vmul.f32 %v1958, %v1916
        %v1975 = vmul.f32 %v1959, %v1918
        %v1976 = vmul.f32 %v1960, %v1920
        %v1977 = vmul.f32 %v1961, %v1922
        %v1978 = vmul.f32 %v1962, %v1924
        %v1979 = vmul.f32 %v1963, %v1926
        %v1980 = vmul.f32 %v1964, %v1928
        %v1981 = vmul.f32 %v1965, %v1930
        %v1982 = vmul.f32 %v1966, %v1932
        %v1983 = vmul.f32 %v1967, %v1934
        %v1984 = vmul.f32 %v1968, %v1936
        %2001 = vrot.lane.b32.xlu0 %v1969, 124
        %v2002 = vpop.permute.xlu0 %2001
        %2003 = vrot.lane.b32.xlu0 %v1970, 124
        %v2004 = vpop.permute.xlu0 %2003
        %2005 = vrot.lane.b32.xlu0 %v1971, 124
        %v2006 = vpop.permute.xlu0 %2005
        %2007 = vrot.lane.b32.xlu0 %v1972, 124
        %v2008 = vpop.permute.xlu0 %2007
        %2009 = vrot.lane.b32.xlu0 %v1973, 124
        %v2010 = vpop.permute.xlu0 %2009
        %2011 = vrot.lane.b32.xlu0 %v1974, 124
        %v2012 = vpop.permute.xlu0 %2011
        %2013 = vrot.lane.b32.xlu0 %v1975, 124
        %v2014 = vpop.permute.xlu0 %2013
        %2015 = vrot.lane.b32.xlu0 %v1976, 124
        %v2016 = vpop.permute.xlu0 %2015
        %2017 = vrot.lane.b32.xlu0 %v1977, 124
        %v2018 = vpop.permute.xlu0 %2017
        %2019 = vrot.lane.b32.xlu0 %v1978, 124
        %v2020 = vpop.permute.xlu0 %2019
        %2021 = vrot.lane.b32.xlu0 %v1979, 124
        %v2022 = vpop.permute.xlu0 %2021
        %2023 = vrot.lane.b32.xlu0 %v1980, 124
        %v2024 = vpop.permute.xlu0 %2023
        %2025 = vrot.lane.b32.xlu0 %v1981, 124
        %v2026 = vpop.permute.xlu0 %2025
        %2027 = vrot.lane.b32.xlu0 %v1982, 124
        %v2028 = vpop.permute.xlu0 %2027
        %2029 = vrot.lane.b32.xlu0 %v1983, 124
        %v2030 = vpop.permute.xlu0 %2029
        %2031 = vrot.lane.b32.xlu0 %v1984, 124
        %v2032 = vpop.permute.xlu0 %2031
        %v2049 = vadd.f32 %v1857, %v2002
        %v2050 = vadd.f32 %v1858, %v2004
        %v2051 = vadd.f32 %v1859, %v2006
        %v2052 = vadd.f32 %v1860, %v2008
        %v2053 = vadd.f32 %v1861, %v2010
        %v2054 = vadd.f32 %v1862, %v2012
        %v2055 = vadd.f32 %v1863, %v2014
        %v2056 = vadd.f32 %v1864, %v2016
        %v2057 = vadd.f32 %v1865, %v2018
        %v2058 = vadd.f32 %v1866, %v2020
        %v2059 = vadd.f32 %v1867, %v2022
        %v2060 = vadd.f32 %v1868, %v2024
        %v2061 = vadd.f32 %v1869, %v2026
        %v2062 = vadd.f32 %v1870, %v2028
        %v2063 = vadd.f32 %v1871, %v2030
        %v2064 = vadd.f32 %v1872, %v2032
        %v2065 = vmax.f32 %v2049, 0.0
        %v2066 = vmax.f32 %v2050, 0.0
        %v2067 = vmax.f32 %v2051, 0.0
        %v2068 = vmax.f32 %v2052, 0.0
        %v2069 = vmax.f32 %v2053, 0.0
        %v2070 = vmax.f32 %v2054, 0.0
        %v2071 = vmax.f32 %v2055, 0.0
        %v2072 = vmax.f32 %v2056, 0.0
        %v2073 = vmax.f32 %v2057, 0.0
        %v2074 = vmax.f32 %v2058, 0.0
        %v2075 = vmax.f32 %v2059, 0.0
        %v2076 = vmax.f32 %v2060, 0.0
        %v2077 = vmax.f32 %v2061, 0.0
        %v2078 = vmax.f32 %v2062, 0.0
        %v2079 = vmax.f32 %v2063, 0.0
        %v2080 = vmax.f32 %v2064, 0.0
        %v2081 = vmin.f32 %v2065, 1.0
        %v2082 = vmin.f32 %v2066, 1.0
        %v2083 = vmin.f32 %v2067, 1.0
        %v2084 = vmin.f32 %v2068, 1.0
        %v2085 = vmin.f32 %v2069, 1.0
        %v2086 = vmin.f32 %v2070, 1.0
        %v2087 = vmin.f32 %v2071, 1.0
        %v2088 = vmin.f32 %v2072, 1.0
        %v2089 = vmin.f32 %v2073, 1.0
        %v2090 = vmin.f32 %v2074, 1.0
        %v2091 = vmin.f32 %v2075, 1.0
        %v2092 = vmin.f32 %v2076, 1.0
        %v2093 = vmin.f32 %v2077, 1.0
        %v2094 = vmin.f32 %v2078, 1.0
        %v2095 = vmin.f32 %v2079, 1.0
        %v2096 = vmin.f32 %v2080, 1.0
        %v2097 = vrsqrt.pop %v2081
        %v2098 = vmul.f32 %v2097, %v2081
        %v2099 = vmul.f32 %v2098, %v2097
        %v2100 = vmul.f32 0.5, %v2099
        %v2101 = vsub.f32 1.5, %v2100
        %v2102 = vmul.f32 %v2097, %v2101
        %v2103 = vmul.f32 %v2081, %v2102
        %vm2104 = vcmp.eq.f32.partialorder %v2081, inf
        %v2105 = vsel %vm2104, %v2081, %v2103
        %vm2106 = vcmp.eq.f32.partialorder %v2081, 0.0
        %v2107 = vand.u32 %v2081, 2147483648
        %v2108 = vsel %vm2106, %v2107, %v2105
        %v2109 = vrsqrt.pop %v2082
        %v2110 = vmul.f32 %v2109, %v2082
        %v2111 = vmul.f32 %v2110, %v2109
        %v2112 = vmul.f32 0.5, %v2111
        %v2113 = vsub.f32 1.5, %v2112
        %v2114 = vmul.f32 %v2109, %v2113
        %v2115 = vmul.f32 %v2082, %v2114
        %vm2116 = vcmp.eq.f32.partialorder %v2082, inf
        %v2117 = vsel %vm2116, %v2082, %v2115
        %vm2118 = vcmp.eq.f32.partialorder %v2082, 0.0
        %v2119 = vand.u32 %v2082, 2147483648
        %v2120 = vsel %vm2118, %v2119, %v2117
        %v2121 = vrsqrt.pop %v2083
        %v2122 = vmul.f32 %v2121, %v2083
        %v2123 = vmul.f32 %v2122, %v2121
        %v2124 = vmul.f32 0.5, %v2123
        %v2125 = vsub.f32 1.5, %v2124
        %v2126 = vmul.f32 %v2121, %v2125
        %v2127 = vmul.f32 %v2083, %v2126
        %vm2128 = vcmp.eq.f32.partialorder %v2083, inf
        %v2129 = vsel %vm2128, %v2083, %v2127
        %vm2130 = vcmp.eq.f32.partialorder %v2083, 0.0
        %v2131 = vand.u32 %v2083, 2147483648
        %v2132 = vsel %vm2130, %v2131, %v2129
        %v2133 = vrsqrt.pop %v2084
        %v2134 = vmul.f32 %v2133, %v2084
        %v2135 = vmul.f32 %v2134, %v2133
        %v2136 = vmul.f32 0.5, %v2135
        %v2137 = vsub.f32 1.5, %v2136
        %v2138 = vmul.f32 %v2133, %v2137
        %v2139 = vmul.f32 %v2084, %v2138
        %vm2140 = vcmp.eq.f32.partialorder %v2084, inf
        %v2141 = vsel %vm2140, %v2084, %v2139
        %vm2142 = vcmp.eq.f32.partialorder %v2084, 0.0
        %v2143 = vand.u32 %v2084, 2147483648
        %v2144 = vsel %vm2142, %v2143, %v2141
        %v2145 = vrsqrt.pop %v2085
        %v2146 = vmul.f32 %v2145, %v2085
        %v2147 = vmul.f32 %v2146, %v2145
        %v2148 = vmul.f32 0.5, %v2147
        %v2149 = vsub.f32 1.5, %v2148
        %v2150 = vmul.f32 %v2145, %v2149
        %v2151 = vmul.f32 %v2085, %v2150
        %vm2152 = vcmp.eq.f32.partialorder %v2085, inf
        %v2153 = vsel %vm2152, %v2085, %v2151
        %vm2154 = vcmp.eq.f32.partialorder %v2085, 0.0
        %v2155 = vand.u32 %v2085, 2147483648
        %v2156 = vsel %vm2154, %v2155, %v2153
        %v2157 = vrsqrt.pop %v2086
        %v2158 = vmul.f32 %v2157, %v2086
        %v2159 = vmul.f32 %v2158, %v2157
        %v2160 = vmul.f32 0.5, %v2159
        %v2161 = vsub.f32 1.5, %v2160
        %v2162 = vmul.f32 %v2157, %v2161
        %v2163 = vmul.f32 %v2086, %v2162
        %vm2164 = vcmp.eq.f32.partialorder %v2086, inf
        %v2165 = vsel %vm2164, %v2086, %v2163
        %vm2166 = vcmp.eq.f32.partialorder %v2086, 0.0
        %v2167 = vand.u32 %v2086, 2147483648
        %v2168 = vsel %vm2166, %v2167, %v2165
        %v2169 = vrsqrt.pop %v2087
        %v2170 = vmul.f32 %v2169, %v2087
        %v2171 = vmul.f32 %v2170, %v2169
        %v2172 = vmul.f32 0.5, %v2171
        %v2173 = vsub.f32 1.5, %v2172
        %v2174 = vmul.f32 %v2169, %v2173
        %v2175 = vmul.f32 %v2087, %v2174
        %vm2176 = vcmp.eq.f32.partialorder %v2087, inf
        %v2177 = vsel %vm2176, %v2087, %v2175
        %vm2178 = vcmp.eq.f32.partialorder %v2087, 0.0
        %v2179 = vand.u32 %v2087, 2147483648
        %v2180 = vsel %vm2178, %v2179, %v2177
        %v2181 = vrsqrt.pop %v2088
        %v2182 = vmul.f32 %v2181, %v2088
        %v2183 = vmul.f32 %v2182, %v2181
        %v2184 = vmul.f32 0.5, %v2183
        %v2185 = vsub.f32 1.5, %v2184
        %v2186 = vmul.f32 %v2181, %v2185
        %v2187 = vmul.f32 %v2088, %v2186
        %vm2188 = vcmp.eq.f32.partialorder %v2088, inf
        %v2189 = vsel %vm2188, %v2088, %v2187
        %vm2190 = vcmp.eq.f32.partialorder %v2088, 0.0
        %v2191 = vand.u32 %v2088, 2147483648
        %v2192 = vsel %vm2190, %v2191, %v2189
        %v2193 = vrsqrt.pop %v2089
        %v2194 = vmul.f32 %v2193, %v2089
        %v2195 = vmul.f32 %v2194, %v2193
        %v2196 = vmul.f32 0.5, %v2195
        %v2197 = vsub.f32 1.5, %v2196
        %v2198 = vmul.f32 %v2193, %v2197
        %v2199 = vmul.f32 %v2089, %v2198
        %vm2200 = vcmp.eq.f32.partialorder %v2089, inf
        %v2201 = vsel %vm2200, %v2089, %v2199
        %vm2202 = vcmp.eq.f32.partialorder %v2089, 0.0
        %v2203 = vand.u32 %v2089, 2147483648
        %v2204 = vsel %vm2202, %v2203, %v2201
        %v2205 = vrsqrt.pop %v2090
        %v2206 = vmul.f32 %v2205, %v2090
        %v2207 = vmul.f32 %v2206, %v2205
        %v2208 = vmul.f32 0.5, %v2207
        %v2209 = vsub.f32 1.5, %v2208
        %v2210 = vmul.f32 %v2205, %v2209
        %v2211 = vmul.f32 %v2090, %v2210
        %vm2212 = vcmp.eq.f32.partialorder %v2090, inf
        %v2213 = vsel %vm2212, %v2090, %v2211
        %vm2214 = vcmp.eq.f32.partialorder %v2090, 0.0
        %v2215 = vand.u32 %v2090, 2147483648
        %v2216 = vsel %vm2214, %v2215, %v2213
        %v2217 = vrsqrt.pop %v2091
        %v2218 = vmul.f32 %v2217, %v2091
        %v2219 = vmul.f32 %v2218, %v2217
        %v2220 = vmul.f32 0.5, %v2219
        %v2221 = vsub.f32 1.5, %v2220
        %v2222 = vmul.f32 %v2217, %v2221
        %v2223 = vmul.f32 %v2091, %v2222
        %vm2224 = vcmp.eq.f32.partialorder %v2091, inf
        %v2225 = vsel %vm2224, %v2091, %v2223
        %vm2226 = vcmp.eq.f32.partialorder %v2091, 0.0
        %v2227 = vand.u32 %v2091, 2147483648
        %v2228 = vsel %vm2226, %v2227, %v2225
        %v2229 = vrsqrt.pop %v2092
        %v2230 = vmul.f32 %v2229, %v2092
        %v2231 = vmul.f32 %v2230, %v2229
        %v2232 = vmul.f32 0.5, %v2231
        %v2233 = vsub.f32 1.5, %v2232
        %v2234 = vmul.f32 %v2229, %v2233
        %v2235 = vmul.f32 %v2092, %v2234
        %vm2236 = vcmp.eq.f32.partialorder %v2092, inf
        %v2237 = vsel %vm2236, %v2092, %v2235
        %vm2238 = vcmp.eq.f32.partialorder %v2092, 0.0
        %v2239 = vand.u32 %v2092, 2147483648
        %v2240 = vsel %vm2238, %v2239, %v2237
        %v2241 = vrsqrt.pop %v2093
        %v2242 = vmul.f32 %v2241, %v2093
        %v2243 = vmul.f32 %v2242, %v2241
        %v2244 = vmul.f32 0.5, %v2243
        %v2245 = vsub.f32 1.5, %v2244
        %v2246 = vmul.f32 %v2241, %v2245
        %v2247 = vmul.f32 %v2093, %v2246
        %vm2248 = vcmp.eq.f32.partialorder %v2093, inf
        %v2249 = vsel %vm2248, %v2093, %v2247
        %vm2250 = vcmp.eq.f32.partialorder %v2093, 0.0
        %v2251 = vand.u32 %v2093, 2147483648
        %v2252 = vsel %vm2250, %v2251, %v2249
        %v2253 = vrsqrt.pop %v2094
        %v2254 = vmul.f32 %v2253, %v2094
        %v2255 = vmul.f32 %v2254, %v2253
        %v2256 = vmul.f32 0.5, %v2255
        %v2257 = vsub.f32 1.5, %v2256
        %v2258 = vmul.f32 %v2253, %v2257
        %v2259 = vmul.f32 %v2094, %v2258
        %vm2260 = vcmp.eq.f32.partialorder %v2094, inf
        %v2261 = vsel %vm2260, %v2094, %v2259
        %vm2262 = vcmp.eq.f32.partialorder %v2094, 0.0
        %v2263 = vand.u32 %v2094, 2147483648
        %v2264 = vsel %vm2262, %v2263, %v2261
        %v2265 = vrsqrt.pop %v2095
        %v2266 = vmul.f32 %v2265, %v2095
        %v2267 = vmul.f32 %v2266, %v2265
        %v2268 = vmul.f32 0.5, %v2267
        %v2269 = vsub.f32 1.5, %v2268
        %v2270 = vmul.f32 %v2265, %v2269
        %v2271 = vmul.f32 %v2095, %v2270
        %vm2272 = vcmp.eq.f32.partialorder %v2095, inf
        %v2273 = vsel %vm2272, %v2095, %v2271
        %vm2274 = vcmp.eq.f32.partialorder %v2095, 0.0
        %v2275 = vand.u32 %v2095, 2147483648
        %v2276 = vsel %vm2274, %v2275, %v2273
        %v2277 = vrsqrt.pop %v2096
        %v2278 = vmul.f32 %v2277, %v2096
        %v2279 = vmul.f32 %v2278, %v2277
        %v2280 = vmul.f32 0.5, %v2279
        %v2281 = vsub.f32 1.5, %v2280
        %v2282 = vmul.f32 %v2277, %v2281
        %v2283 = vmul.f32 %v2096, %v2282
        %vm2284 = vcmp.eq.f32.partialorder %v2096, inf
        %v2285 = vsel %vm2284, %v2096, %v2283
        %vm2286 = vcmp.eq.f32.partialorder %v2096, 0.0
        %v2287 = vand.u32 %v2096, 2147483648
        %v2288 = vsel %vm2286, %v2287, %v2285
        %v2289 = vmul.f32 %v2108, -0.0012624911
        %v2290 = vmul.f32 %v2120, -0.0012624911
        %v2291 = vmul.f32 %v2132, -0.0012624911
        %v2292 = vmul.f32 %v2144, -0.0012624911
        %v2293 = vmul.f32 %v2156, -0.0012624911
        %v2294 = vmul.f32 %v2168, -0.0012624911
        %v2295 = vmul.f32 %v2180, -0.0012624911
        %v2296 = vmul.f32 %v2192, -0.0012624911
        %v2297 = vmul.f32 %v2204, -0.0012624911
        %v2298 = vmul.f32 %v2216, -0.0012624911
        %v2299 = vmul.f32 %v2228, -0.0012624911
        %v2300 = vmul.f32 %v2240, -0.0012624911
        %v2301 = vmul.f32 %v2252, -0.0012624911
        %v2302 = vmul.f32 %v2264, -0.0012624911
        %v2303 = vmul.f32 %v2276, -0.0012624911
        %v2304 = vmul.f32 %v2288, -0.0012624911
        %v2305 = vadd.f32 %v2289, 0.00667009
        %v2306 = vadd.f32 %v2290, 0.00667009
        %v2307 = vadd.f32 %v2291, 0.00667009
        %v2308 = vadd.f32 %v2292, 0.00667009
        %v2309 = vadd.f32 %v2293, 0.00667009
        %v2310 = vadd.f32 %v2294, 0.00667009
        %v2311 = vadd.f32 %v2295, 0.00667009
        %v2312 = vadd.f32 %v2296, 0.00667009
        %v2313 = vadd.f32 %v2297, 0.00667009
        %v2314 = vadd.f32 %v2298, 0.00667009
        %v2315 = vadd.f32 %v2299, 0.00667009
        %v2316 = vadd.f32 %v2300, 0.00667009
        %v2317 = vadd.f32 %v2301, 0.00667009
        %v2318 = vadd.f32 %v2302, 0.00667009
        %v2319 = vadd.f32 %v2303, 0.00667009
        %v2320 = vadd.f32 %v2304, 0.00667009
        %v2321 = vmul.f32 %v2305, %v2108
        %v2322 = vmul.f32 %v2306, %v2120
        %v2323 = vmul.f32 %v2307, %v2132
        %v2324 = vmul.f32 %v2308, %v2144
        %v2325 = vmul.f32 %v2309, %v2156
        %v2326 = vmul.f32 %v2310, %v2168
        %v2327 = vmul.f32 %v2311, %v2180
        %v2328 = vmul.f32 %v2312, %v2192
        %v2329 = vmul.f32 %v2313, %v2204
        %v2330 = vmul.f32 %v2314, %v2216
        %v2331 = vmul.f32 %v2315, %v2228
        %v2332 = vmul.f32 %v2316, %v2240
        %v2333 = vmul.f32 %v2317, %v2252
        %v2334 = vmul.f32 %v2318, %v2264
        %v2335 = vmul.f32 %v2319, %v2276
        %v2336 = vmul.f32 %v2320, %v2288
        %v2337 = vadd.f32 %v2321, -0.017088126
        %v2338 = vadd.f32 %v2322, -0.017088126
        %v2339 = vadd.f32 %v2323, -0.017088126
        %v2340 = vadd.f32 %v2324, -0.017088126
        %v2341 = vadd.f32 %v2325, -0.017088126
        %v2342 = vadd.f32 %v2326, -0.017088126
        %v2343 = vadd.f32 %v2327, -0.017088126
        %v2344 = vadd.f32 %v2328, -0.017088126
        %v2345 = vadd.f32 %v2329, -0.017088126
        %v2346 = vadd.f32 %v2330, -0.017088126
        %v2347 = vadd.f32 %v2331, -0.017088126
        %v2348 = vadd.f32 %v2332, -0.017088126
        %v2349 = vadd.f32 %v2333, -0.017088126
        %v2350 = vadd.f32 %v2334, -0.017088126
        %v2351 = vadd.f32 %v2335, -0.017088126
        %v2352 = vadd.f32 %v2336, -0.017088126
        %v2353 = vmul.f32 %v2337, %v2108
        %v2354 = vmul.f32 %v2338, %v2120
        %v2355 = vmul.f32 %v2339, %v2132
        %v2356 = vmul.f32 %v2340, %v2144
        %v2357 = vmul.f32 %v2341, %v2156
        %v2358 = vmul.f32 %v2342, %v2168
        %v2359 = vmul.f32 %v2343, %v2180
        %v2360 = vmul.f32 %v2344, %v2192
        %v2361 = vmul.f32 %v2345, %v2204
        %v2362 = vmul.f32 %v2346, %v2216
        %v2363 = vmul.f32 %v2347, %v2228
        %v2364 = vmul.f32 %v2348, %v2240
        %v2365 = vmul.f32 %v2349, %v2252
        %v2366 = vmul.f32 %v2350, %v2264
        %v2367 = vmul.f32 %v2351, %v2276
        %v2368 = vmul.f32 %v2352, %v2288
        %v2369 = vadd.f32 %v2353, 0.03089188
        %v2370 = vadd.f32 %v2354, 0.03089188
        %v2371 = vadd.f32 %v2355, 0.03089188
        %v2372 = vadd.f32 %v2356, 0.03089188
        %v2373 = vadd.f32 %v2357, 0.03089188
        %v2374 = vadd.f32 %v2358, 0.03089188
        %v2375 = vadd.f32 %v2359, 0.03089188
        %v2376 = vadd.f32 %v2360, 0.03089188
        %v2377 = vadd.f32 %v2361, 0.03089188
        %v2378 = vadd.f32 %v2362, 0.03089188
        %v2379 = vadd.f32 %v2363, 0.03089188
        %v2380 = vadd.f32 %v2364, 0.03089188
        %v2381 = vadd.f32 %v2365, 0.03089188
        %v2382 = vadd.f32 %v2366, 0.03089188
        %v2383 = vadd.f32 %v2367, 0.03089188
        %v2384 = vadd.f32 %v2368, 0.03089188
        %v2385 = vmul.f32 %v2369, %v2108
        %v2386 = vmul.f32 %v2370, %v2120
        %v2387 = vmul.f32 %v2371, %v2132
        %v2388 = vmul.f32 %v2372, %v2144
        %v2389 = vmul.f32 %v2373, %v2156
        %v2390 = vmul.f32 %v2374, %v2168
        %v2391 = vmul.f32 %v2375, %v2180
        %v2392 = vmul.f32 %v2376, %v2192
        %v2393 = vmul.f32 %v2377, %v2204
        %v2394 = vmul.f32 %v2378, %v2216
        %v2395 = vmul.f32 %v2379, %v2228
        %v2396 = vmul.f32 %v2380, %v2240
        %v2397 = vmul.f32 %v2381, %v2252
        %v2398 = vmul.f32 %v2382, %v2264
        %v2399 = vmul.f32 %v2383, %v2276
        %v2400 = vmul.f32 %v2384, %v2288
        %v2401 = vadd.f32 %v2385, -0.050174303
        %v2402 = vadd.f32 %v2386, -0.050174303
        %v2403 = vadd.f32 %v2387, -0.050174303
        %v2404 = vadd.f32 %v2388, -0.050174303
        %v2405 = vadd.f32 %v2389, -0.050174303
        %v2406 = vadd.f32 %v2390, -0.050174303
        %v2407 = vadd.f32 %v2391, -0.050174303
        %v2408 = vadd.f32 %v2392, -0.050174303
        %v2409 = vadd.f32 %v2393, -0.050174303
        %v2410 = vadd.f32 %v2394, -0.050174303
        %v2411 = vadd.f32 %v2395, -0.050174303
        %v2412 = vadd.f32 %v2396, -0.050174303
        %v2413 = vadd.f32 %v2397, -0.050174303
        %v2414 = vadd.f32 %v2398, -0.050174303
        %v2415 = vadd.f32 %v2399, -0.050174303
        %v2416 = vadd.f32 %v2400, -0.050174303
        %v2417 = vmul.f32 %v2401, %v2108
        %v2418 = vmul.f32 %v2402, %v2120
        %v2419 = vmul.f32 %v2403, %v2132
        %v2420 = vmul.f32 %v2404, %v2144
        %v2421 = vmul.f32 %v2405, %v2156
        %v2422 = vmul.f32 %v2406, %v2168
        %v2423 = vmul.f32 %v2407, %v2180
        %v2424 = vmul.f32 %v2408, %v2192
        %v2425 = vmul.f32 %v2409, %v2204
        %v2426 = vmul.f32 %v2410, %v2216
        %v2427 = vmul.f32 %v2411, %v2228
        %v2428 = vmul.f32 %v2412, %v2240
        %v2429 = vmul.f32 %v2413, %v2252
        %v2430 = vmul.f32 %v2414, %v2264
        %v2431 = vmul.f32 %v2415, %v2276
        %v2432 = vmul.f32 %v2416, %v2288
        %v2433 = vadd.f32 %v2417, 0.08897899
        %v2434 = vadd.f32 %v2418, 0.08897899
        %v2435 = vadd.f32 %v2419, 0.08897899
        %v2436 = vadd.f32 %v2420, 0.08897899
        %v2437 = vadd.f32 %v2421, 0.08897899
        %v2438 = vadd.f32 %v2422, 0.08897899
        %v2439 = vadd.f32 %v2423, 0.08897899
        %v2440 = vadd.f32 %v2424, 0.08897899
        %v2441 = vadd.f32 %v2425, 0.08897899
        %v2442 = vadd.f32 %v2426, 0.08897899
        %v2443 = vadd.f32 %v2427, 0.08897899
        %v2444 = vadd.f32 %v2428, 0.08897899
        %v2445 = vadd.f32 %v2429, 0.08897899
        %v2446 = vadd.f32 %v2430, 0.08897899
        %v2447 = vadd.f32 %v2431, 0.08897899
        %v2448 = vadd.f32 %v2432, 0.08897899
        %v2449 = vmul.f32 %v2433, %v2108
        %v2450 = vmul.f32 %v2434, %v2120
        %v2451 = vmul.f32 %v2435, %v2132
        %v2452 = vmul.f32 %v2436, %v2144
        %v2453 = vmul.f32 %v2437, %v2156
        %v2454 = vmul.f32 %v2438, %v2168
        %v2455 = vmul.f32 %v2439, %v2180
        %v2456 = vmul.f32 %v2440, %v2192
        %v2457 = vmul.f32 %v2441, %v2204
        %v2458 = vmul.f32 %v2442, %v2216
        %v2459 = vmul.f32 %v2443, %v2228
        %v2460 = vmul.f32 %v2444, %v2240
        %v2461 = vmul.f32 %v2445, %v2252
        %v2462 = vmul.f32 %v2446, %v2264
        %v2463 = vmul.f32 %v2447, %v2276
        %v2464 = vmul.f32 %v2448, %v2288
        %v2465 = vadd.f32 %v2449, -0.2145988
        %v2466 = vadd.f32 %v2450, -0.2145988
        %v2467 = vadd.f32 %v2451, -0.2145988
        %v2468 = vadd.f32 %v2452, -0.2145988
        %v2469 = vadd.f32 %v2453, -0.2145988
        %v2470 = vadd.f32 %v2454, -0.2145988
        %v2471 = vadd.f32 %v2455, -0.2145988
        %v2472 = vadd.f32 %v2456, -0.2145988
        %v2473 = vadd.f32 %v2457, -0.2145988
        %v2474 = vadd.f32 %v2458, -0.2145988
        %v2475 = vadd.f32 %v2459, -0.2145988
        %v2476 = vadd.f32 %v2460, -0.2145988
        %v2477 = vadd.f32 %v2461, -0.2145988
        %v2478 = vadd.f32 %v2462, -0.2145988
        %v2479 = vadd.f32 %v2463, -0.2145988
        %v2480 = vadd.f32 %v2464, -0.2145988
        %v2481 = vmul.f32 %v2465, %v2108
        %v2482 = vmul.f32 %v2466, %v2120
        %v2483 = vmul.f32 %v2467, %v2132
        %v2484 = vmul.f32 %v2468, %v2144
        %v2485 = vmul.f32 %v2469, %v2156
        %v2486 = vmul.f32 %v2470, %v2168
        %v2487 = vmul.f32 %v2471, %v2180
        %v2488 = vmul.f32 %v2472, %v2192
        %v2489 = vmul.f32 %v2473, %v2204
        %v2490 = vmul.f32 %v2474, %v2216
        %v2491 = vmul.f32 %v2475, %v2228
        %v2492 = vmul.f32 %v2476, %v2240
        %v2493 = vmul.f32 %v2477, %v2252
        %v2494 = vmul.f32 %v2478, %v2264
        %v2495 = vmul.f32 %v2479, %v2276
        %v2496 = vmul.f32 %v2480, %v2288
        %v2497 = vadd.f32 %v2481, 1.5707963
        %v2498 = vadd.f32 %v2482, 1.5707963
        %v2499 = vadd.f32 %v2483, 1.5707963
        %v2500 = vadd.f32 %v2484, 1.5707963
        %v2501 = vadd.f32 %v2485, 1.5707963
        %v2502 = vadd.f32 %v2486, 1.5707963
        %v2503 = vadd.f32 %v2487, 1.5707963
        %v2504 = vadd.f32 %v2488, 1.5707963
        %v2505 = vadd.f32 %v2489, 1.5707963
        %v2506 = vadd.f32 %v2490, 1.5707963
        %v2507 = vadd.f32 %v2491, 1.5707963
        %v2508 = vadd.f32 %v2492, 1.5707963
        %v2509 = vadd.f32 %v2493, 1.5707963
        %v2510 = vadd.f32 %v2494, 1.5707963
        %v2511 = vadd.f32 %v2495, 1.5707963
        %v2512 = vadd.f32 %v2496, 1.5707963
        %v2513 = vsub.f32 1.0, %v2108
        %v2514 = vsub.f32 1.0, %v2120
        %v2515 = vsub.f32 1.0, %v2132
        %v2516 = vsub.f32 1.0, %v2144
        %v2517 = vsub.f32 1.0, %v2156
        %v2518 = vsub.f32 1.0, %v2168
        %v2519 = vsub.f32 1.0, %v2180
        %v2520 = vsub.f32 1.0, %v2192
        %v2521 = vsub.f32 1.0, %v2204
        %v2522 = vsub.f32 1.0, %v2216
        %v2523 = vsub.f32 1.0, %v2228
        %v2524 = vsub.f32 1.0, %v2240
        %v2525 = vsub.f32 1.0, %v2252
        %v2526 = vsub.f32 1.0, %v2264
        %v2527 = vsub.f32 1.0, %v2276
        %v2528 = vsub.f32 1.0, %v2288
        %v2529 = vmax.f32 %v2513, 0.0
        %v2530 = vmax.f32 %v2514, 0.0
        %v2531 = vmax.f32 %v2515, 0.0
        %v2532 = vmax.f32 %v2516, 0.0
        %v2533 = vmax.f32 %v2517, 0.0
        %v2534 = vmax.f32 %v2518, 0.0
        %v2535 = vmax.f32 %v2519, 0.0
        %v2536 = vmax.f32 %v2520, 0.0
        %v2537 = vmax.f32 %v2521, 0.0
        %v2538 = vmax.f32 %v2522, 0.0
        %v2539 = vmax.f32 %v2523, 0.0
        %v2540 = vmax.f32 %v2524, 0.0
        %v2541 = vmax.f32 %v2525, 0.0
        %v2542 = vmax.f32 %v2526, 0.0
        %v2543 = vmax.f32 %v2527, 0.0
        %v2544 = vmax.f32 %v2528, 0.0
        %v2545 = vrsqrt.pop %v2529
        %v2546 = vmul.f32 %v2545, %v2529
        %v2547 = vmul.f32 %v2546, %v2545
        %v2548 = vmul.f32 0.5, %v2547
        %v2549 = vsub.f32 1.5, %v2548
        %v2550 = vmul.f32 %v2545, %v2549
        %v2551 = vmul.f32 %v2529, %v2550
        %vm2552 = vcmp.eq.f32.partialorder %v2529, inf
        %v2553 = vsel %vm2552, %v2529, %v2551
        %vm2554 = vcmp.eq.f32.partialorder %v2529, 0.0
        %v2555 = vand.u32 %v2529, 2147483648
        %v2556 = vsel %vm2554, %v2555, %v2553
        %v2557 = vrsqrt.pop %v2530
        %v2558 = vmul.f32 %v2557, %v2530
        %v2559 = vmul.f32 %v2558, %v2557
        %v2560 = vmul.f32 0.5, %v2559
        %v2561 = vsub.f32 1.5, %v2560
        %v2562 = vmul.f32 %v2557, %v2561
        %v2563 = vmul.f32 %v2530, %v2562
        %vm2564 = vcmp.eq.f32.partialorder %v2530, inf
        %v2565 = vsel %vm2564, %v2530, %v2563
        %vm2566 = vcmp.eq.f32.partialorder %v2530, 0.0
        %v2567 = vand.u32 %v2530, 2147483648
        %v2568 = vsel %vm2566, %v2567, %v2565
        %v2569 = vrsqrt.pop %v2531
        %v2570 = vmul.f32 %v2569, %v2531
        %v2571 = vmul.f32 %v2570, %v2569
        %v2572 = vmul.f32 0.5, %v2571
        %v2573 = vsub.f32 1.5, %v2572
        %v2574 = vmul.f32 %v2569, %v2573
        %v2575 = vmul.f32 %v2531, %v2574
        %vm2576 = vcmp.eq.f32.partialorder %v2531, inf
        %v2577 = vsel %vm2576, %v2531, %v2575
        %vm2578 = vcmp.eq.f32.partialorder %v2531, 0.0
        %v2579 = vand.u32 %v2531, 2147483648
        %v2580 = vsel %vm2578, %v2579, %v2577
        %v2581 = vrsqrt.pop %v2532
        %v2582 = vmul.f32 %v2581, %v2532
        %v2583 = vmul.f32 %v2582, %v2581
        %v2584 = vmul.f32 0.5, %v2583
        %v2585 = vsub.f32 1.5, %v2584
        %v2586 = vmul.f32 %v2581, %v2585
        %v2587 = vmul.f32 %v2532, %v2586
        %vm2588 = vcmp.eq.f32.partialorder %v2532, inf
        %v2589 = vsel %vm2588, %v2532, %v2587
        %vm2590 = vcmp.eq.f32.partialorder %v2532, 0.0
        %v2591 = vand.u32 %v2532, 2147483648
        %v2592 = vsel %vm2590, %v2591, %v2589
        %v2593 = vrsqrt.pop %v2533
        %v2594 = vmul.f32 %v2593, %v2533
        %v2595 = vmul.f32 %v2594, %v2593
        %v2596 = vmul.f32 0.5, %v2595
        %v2597 = vsub.f32 1.5, %v2596
        %v2598 = vmul.f32 %v2593, %v2597
        %v2599 = vmul.f32 %v2533, %v2598
        %vm2600 = vcmp.eq.f32.partialorder %v2533, inf
        %v2601 = vsel %vm2600, %v2533, %v2599
        %vm2602 = vcmp.eq.f32.partialorder %v2533, 0.0
        %v2603 = vand.u32 %v2533, 2147483648
        %v2604 = vsel %vm2602, %v2603, %v2601
        %v2605 = vrsqrt.pop %v2534
        %v2606 = vmul.f32 %v2605, %v2534
        %v2607 = vmul.f32 %v2606, %v2605
        %v2608 = vmul.f32 0.5, %v2607
        %v2609 = vsub.f32 1.5, %v2608
        %v2610 = vmul.f32 %v2605, %v2609
        %v2611 = vmul.f32 %v2534, %v2610
        %vm2612 = vcmp.eq.f32.partialorder %v2534, inf
        %v2613 = vsel %vm2612, %v2534, %v2611
        %vm2614 = vcmp.eq.f32.partialorder %v2534, 0.0
        %v2615 = vand.u32 %v2534, 2147483648
        %v2616 = vsel %vm2614, %v2615, %v2613
        %v2617 = vrsqrt.pop %v2535
        %v2618 = vmul.f32 %v2617, %v2535
        %v2619 = vmul.f32 %v2618, %v2617
        %v2620 = vmul.f32 0.5, %v2619
        %v2621 = vsub.f32 1.5, %v2620
        %v2622 = vmul.f32 %v2617, %v2621
        %v2623 = vmul.f32 %v2535, %v2622
        %vm2624 = vcmp.eq.f32.partialorder %v2535, inf
        %v2625 = vsel %vm2624, %v2535, %v2623
        %vm2626 = vcmp.eq.f32.partialorder %v2535, 0.0
        %v2627 = vand.u32 %v2535, 2147483648
        %v2628 = vsel %vm2626, %v2627, %v2625
        %v2629 = vrsqrt.pop %v2536
        %v2630 = vmul.f32 %v2629, %v2536
        %v2631 = vmul.f32 %v2630, %v2629
        %v2632 = vmul.f32 0.5, %v2631
        %v2633 = vsub.f32 1.5, %v2632
        %v2634 = vmul.f32 %v2629, %v2633
        %v2635 = vmul.f32 %v2536, %v2634
        %vm2636 = vcmp.eq.f32.partialorder %v2536, inf
        %v2637 = vsel %vm2636, %v2536, %v2635
        %vm2638 = vcmp.eq.f32.partialorder %v2536, 0.0
        %v2639 = vand.u32 %v2536, 2147483648
        %v2640 = vsel %vm2638, %v2639, %v2637
        %v2641 = vrsqrt.pop %v2537
        %v2642 = vmul.f32 %v2641, %v2537
        %v2643 = vmul.f32 %v2642, %v2641
        %v2644 = vmul.f32 0.5, %v2643
        %v2645 = vsub.f32 1.5, %v2644
        %v2646 = vmul.f32 %v2641, %v2645
        %v2647 = vmul.f32 %v2537, %v2646
        %vm2648 = vcmp.eq.f32.partialorder %v2537, inf
        %v2649 = vsel %vm2648, %v2537, %v2647
        %vm2650 = vcmp.eq.f32.partialorder %v2537, 0.0
        %v2651 = vand.u32 %v2537, 2147483648
        %v2652 = vsel %vm2650, %v2651, %v2649
        %v2653 = vrsqrt.pop %v2538
        %v2654 = vmul.f32 %v2653, %v2538
        %v2655 = vmul.f32 %v2654, %v2653
        %v2656 = vmul.f32 0.5, %v2655
        %v2657 = vsub.f32 1.5, %v2656
        %v2658 = vmul.f32 %v2653, %v2657
        %v2659 = vmul.f32 %v2538, %v2658
        %vm2660 = vcmp.eq.f32.partialorder %v2538, inf
        %v2661 = vsel %vm2660, %v2538, %v2659
        %vm2662 = vcmp.eq.f32.partialorder %v2538, 0.0
        %v2663 = vand.u32 %v2538, 2147483648
        %v2664 = vsel %vm2662, %v2663, %v2661
        %v2665 = vrsqrt.pop %v2539
        %v2666 = vmul.f32 %v2665, %v2539
        %v2667 = vmul.f32 %v2666, %v2665
        %v2668 = vmul.f32 0.5, %v2667
        %v2669 = vsub.f32 1.5, %v2668
        %v2670 = vmul.f32 %v2665, %v2669
        %v2671 = vmul.f32 %v2539, %v2670
        %vm2672 = vcmp.eq.f32.partialorder %v2539, inf
        %v2673 = vsel %vm2672, %v2539, %v2671
        %vm2674 = vcmp.eq.f32.partialorder %v2539, 0.0
        %v2675 = vand.u32 %v2539, 2147483648
        %v2676 = vsel %vm2674, %v2675, %v2673
        %v2677 = vrsqrt.pop %v2540
        %v2678 = vmul.f32 %v2677, %v2540
        %v2679 = vmul.f32 %v2678, %v2677
        %v2680 = vmul.f32 0.5, %v2679
        %v2681 = vsub.f32 1.5, %v2680
        %v2682 = vmul.f32 %v2677, %v2681
        %v2683 = vmul.f32 %v2540, %v2682
        %vm2684 = vcmp.eq.f32.partialorder %v2540, inf
        %v2685 = vsel %vm2684, %v2540, %v2683
        %vm2686 = vcmp.eq.f32.partialorder %v2540, 0.0
        %v2687 = vand.u32 %v2540, 2147483648
        %v2688 = vsel %vm2686, %v2687, %v2685
        %v2689 = vrsqrt.pop %v2541
        %v2690 = vmul.f32 %v2689, %v2541
        %v2691 = vmul.f32 %v2690, %v2689
        %v2692 = vmul.f32 0.5, %v2691
        %v2693 = vsub.f32 1.5, %v2692
        %v2694 = vmul.f32 %v2689, %v2693
        %v2695 = vmul.f32 %v2541, %v2694
        %vm2696 = vcmp.eq.f32.partialorder %v2541, inf
        %v2697 = vsel %vm2696, %v2541, %v2695
        %vm2698 = vcmp.eq.f32.partialorder %v2541, 0.0
        %v2699 = vand.u32 %v2541, 2147483648
        %v2700 = vsel %vm2698, %v2699, %v2697
        %v2701 = vrsqrt.pop %v2542
        %v2702 = vmul.f32 %v2701, %v2542
        %v2703 = vmul.f32 %v2702, %v2701
        %v2704 = vmul.f32 0.5, %v2703
        %v2705 = vsub.f32 1.5, %v2704
        %v2706 = vmul.f32 %v2701, %v2705
        %v2707 = vmul.f32 %v2542, %v2706
        %vm2708 = vcmp.eq.f32.partialorder %v2542, inf
        %v2709 = vsel %vm2708, %v2542, %v2707
        %vm2710 = vcmp.eq.f32.partialorder %v2542, 0.0
        %v2711 = vand.u32 %v2542, 2147483648
        %v2712 = vsel %vm2710, %v2711, %v2709
        %v2713 = vrsqrt.pop %v2543
        %v2714 = vmul.f32 %v2713, %v2543
        %v2715 = vmul.f32 %v2714, %v2713
        %v2716 = vmul.f32 0.5, %v2715
        %v2717 = vsub.f32 1.5, %v2716
        %v2718 = vmul.f32 %v2713, %v2717
        %v2719 = vmul.f32 %v2543, %v2718
        %vm2720 = vcmp.eq.f32.partialorder %v2543, inf
        %v2721 = vsel %vm2720, %v2543, %v2719
        %vm2722 = vcmp.eq.f32.partialorder %v2543, 0.0
        %v2723 = vand.u32 %v2543, 2147483648
        %v2724 = vsel %vm2722, %v2723, %v2721
        %v2725 = vrsqrt.pop %v2544
        %v2726 = vmul.f32 %v2725, %v2544
        %v2727 = vmul.f32 %v2726, %v2725
        %v2728 = vmul.f32 0.5, %v2727
        %v2729 = vsub.f32 1.5, %v2728
        %v2730 = vmul.f32 %v2725, %v2729
        %v2731 = vmul.f32 %v2544, %v2730
        %vm2732 = vcmp.eq.f32.partialorder %v2544, inf
        %v2733 = vsel %vm2732, %v2544, %v2731
        %vm2734 = vcmp.eq.f32.partialorder %v2544, 0.0
        %v2735 = vand.u32 %v2544, 2147483648
        %v2736 = vsel %vm2734, %v2735, %v2733
        %v2737 = vmul.f32 %v2556, %v2497
        %v2738 = vmul.f32 %v2568, %v2498
        %v2739 = vmul.f32 %v2580, %v2499
        %v2740 = vmul.f32 %v2592, %v2500
        %v2741 = vmul.f32 %v2604, %v2501
        %v2742 = vmul.f32 %v2616, %v2502
        %v2743 = vmul.f32 %v2628, %v2503
        %v2744 = vmul.f32 %v2640, %v2504
        %v2745 = vmul.f32 %v2652, %v2505
        %v2746 = vmul.f32 %v2664, %v2506
        %v2747 = vmul.f32 %v2676, %v2507
        %v2748 = vmul.f32 %v2688, %v2508
        %v2749 = vmul.f32 %v2700, %v2509
        %v2750 = vmul.f32 %v2712, %v2510
        %v2751 = vmul.f32 %v2724, %v2511
        %v2752 = vmul.f32 %v2736, %v2512
        %v2753 = vsub.f32 1.5707964, %v2737
        %v2754 = vsub.f32 1.5707964, %v2738
        %v2755 = vsub.f32 1.5707964, %v2739
        %v2756 = vsub.f32 1.5707964, %v2740
        %v2757 = vsub.f32 1.5707964, %v2741
        %v2758 = vsub.f32 1.5707964, %v2742
        %v2759 = vsub.f32 1.5707964, %v2743
        %v2760 = vsub.f32 1.5707964, %v2744
        %v2761 = vsub.f32 1.5707964, %v2745
        %v2762 = vsub.f32 1.5707964, %v2746
        %v2763 = vsub.f32 1.5707964, %v2747
        %v2764 = vsub.f32 1.5707964, %v2748
        %v2765 = vsub.f32 1.5707964, %v2749
        %v2766 = vsub.f32 1.5707964, %v2750
        %v2767 = vsub.f32 1.5707964, %v2751
        %v2768 = vsub.f32 1.5707964, %v2752
        %v2769 = vmul.f32 %v2753, 2.0
        %v2770 = vmul.f32 %v2754, 2.0
        %v2771 = vmul.f32 %v2755, 2.0
        %v2772 = vmul.f32 %v2756, 2.0
        %v2773 = vmul.f32 %v2757, 2.0
        %v2774 = vmul.f32 %v2758, 2.0
        %v2775 = vmul.f32 %v2759, 2.0
        %v2776 = vmul.f32 %v2760, 2.0
        %v2777 = vmul.f32 %v2761, 2.0
        %v2778 = vmul.f32 %v2762, 2.0
        %v2779 = vmul.f32 %v2763, 2.0
        %v2780 = vmul.f32 %v2764, 2.0
        %v2781 = vmul.f32 %v2765, 2.0
        %v2782 = vmul.f32 %v2766, 2.0
        %v2783 = vmul.f32 %v2767, 2.0
        %v2784 = vmul.f32 %v2768, 2.0
        %v2785 = vmul.f32 %v2769, 6371.0
        %v2786 = vmul.f32 %v2770, 6371.0
        %v2787 = vmul.f32 %v2771, 6371.0
        %v2788 = vmul.f32 %v2772, 6371.0
        %v2789 = vmul.f32 %v2773, 6371.0
        %v2790 = vmul.f32 %v2774, 6371.0
        %v2791 = vmul.f32 %v2775, 6371.0
        %v2792 = vmul.f32 %v2776, 6371.0
        %v2793 = vmul.f32 %v2777, 6371.0
        %v2794 = vmul.f32 %v2778, 6371.0
        %v2795 = vmul.f32 %v2779, 6371.0
        %v2796 = vmul.f32 %v2780, 6371.0
        %v2797 = vmul.f32 %v2781, 6371.0
        %v2798 = vmul.f32 %v2782, 6371.0
        %v2799 = vmul.f32 %v2783, 6371.0
        %v2800 = vmul.f32 %v2784, 6371.0
        %v2801 = vsel %vm356, %v2785, 0.0
        %v2802 = vsel %vm357, %v2786, 0.0
        %v2803 = vsel %vm358, %v2787, 0.0
        %v2804 = vsel %vm359, %v2788, 0.0
        %v2805 = vsel %vm360, %v2789, 0.0
        %v2806 = vsel %vm361, %v2790, 0.0
        %v2807 = vsel %vm362, %v2791, 0.0
        %v2808 = vsel %vm363, %v2792, 0.0
        %v2809 = vsel %vm364, %v2793, 0.0
        %v2810 = vsel %vm365, %v2794, 0.0
        %v2811 = vsel %vm366, %v2795, 0.0
        %v2812 = vsel %vm367, %v2796, 0.0
        %v2813 = vsel %vm368, %v2797, 0.0
        %v2814 = vsel %vm369, %v2798, 0.0
        %v2815 = vsel %vm370, %v2799, 0.0
        %v2816 = vsel %vm371, %v2800, 0.0
        %v2817 = vsel %vm820, %v2801, 0.0
        %v2818 = vsel %vm820, %v2802, 0.0
        %v2819 = vadd.f32 %v2817, %v2818
        %v2820 = vsel %vm820, %v2803, 0.0
        %v2821 = vadd.f32 %v2819, %v2820
        %v2822 = vsel %vm820, %v2804, 0.0
        %v2823 = vadd.f32 %v2821, %v2822
        %v2824 = vsel %vm820, %v2805, 0.0
        %v2825 = vadd.f32 %v2823, %v2824
        %v2826 = vsel %vm820, %v2806, 0.0
        %v2827 = vadd.f32 %v2825, %v2826
        %v2828 = vsel %vm820, %v2807, 0.0
        %v2829 = vadd.f32 %v2827, %v2828
        %v2830 = vsel %vm820, %v2808, 0.0
        %v2831 = vadd.f32 %v2829, %v2830
        %v2832 = vsel %vm820, %v2809, 0.0
        %v2833 = vadd.f32 %v2831, %v2832
        %v2834 = vsel %vm820, %v2810, 0.0
        %v2835 = vadd.f32 %v2833, %v2834
        %v2836 = vsel %vm820, %v2811, 0.0
        %v2837 = vadd.f32 %v2835, %v2836
        %v2838 = vsel %vm820, %v2812, 0.0
        %v2839 = vadd.f32 %v2837, %v2838
        %v2840 = vsel %vm820, %v2813, 0.0
        %v2841 = vadd.f32 %v2839, %v2840
        %v2842 = vsel %vm820, %v2814, 0.0
        %v2843 = vadd.f32 %v2841, %v2842
        %v2844 = vsel %vm820, %v2815, 0.0
        %v2845 = vadd.f32 %v2843, %v2844
        %v2846 = vsel %vm820, %v2816, 0.0
        %v2847 = vadd.f32 %v2845, %v2846
        %2848 = vadd.xlane.f32.xlu0 %v2847
        %v2849 = vpop.xlane.xlu0 %2848
        %v2850 = vrot.slane %v2849, 4
        %v2851 = vadd.f32 %v2849, %v2850
        %v2852 = vrot.slane %v2851, 2
        %v2853 = vadd.f32 %v2851, %v2852
        %v2854 = vrot.slane %v2853, 1
        %v2855 = vadd.f32 %v2853, %v2854
        %s2856 = vtos %v2855
        %v2857 = vstv %s860
        %2858 = vst [vmem:[%s258] sm:$0xff] %v2857
        %v2859 = vstv %s2856
        %2860 = vst [vmem:[%s265] sm:$0xff] %v2859
        %s2861 = sand.u32 %s106, 1
        %s2862 = scalar_lea.sflag [#allocation4], %s2861
        %s2863 = sand.u32 %s106, 1
        %s2864 = smul.addr %s2863, 8
        %s2865 = scalar_lea.vmem [#allocation5], %s2864
        %s2866 = sand.u32 %s132, 1
        %s2867 = scalar_lea.sflag [#allocation7], %s2866
        %s2868 = sand.u32 %s132, 1
        %s2869 = smul.addr %s2868, 8
        %s2870 = scalar_lea.vmem [#allocation6], %s2869
        // Predicated region
        $region37: #{tpu_custom_call.1} parent=31 // pred_check
          %p2871 = pneg %p116
        $region38: #{tpu_custom_call.1} parent=31 // pred_check_branch
          %2873 = sbr.rel (%p2871) target = $region40
        $region39: #{tpu_custom_call.1} parent=31 // pred_region
          %2875 = vsyncadd %s2862, 0
          %s2876 = smul.addr %s25, 8
          %s2877 = scalar_lea.hbm %s3, %s2876
          %s2879 = sshll.u32 %s2865, 4
          %s2880 = int_to_ptr.vmem [resolvable:$true] %s2879
          %s2881 = sshll.u32 %s2877, 4
          %s2882 = int_to_ptr.hbm [resolvable:$true] %s2881
          %2884 = dma.vmem_to_hbm [thread:$0]  %s2880, 128, %s2882, %s2862
        $region40: #{tpu_custom_call.1} parent=31 // pred_fallthru
          _
        // Predicated region
        $region41: #{tpu_custom_call.1} parent=31 // pred_check
          %p2885 = pneg %p142
        $region42: #{tpu_custom_call.1} parent=31 // pred_check_branch
          %2887 = sbr.rel (%p2885) target = $region44
        $region43: #{tpu_custom_call.1} parent=31 // pred_region
          %2889 = vsyncadd %s2867, 0
          %s2890 = smul.addr %s25, 8
          %s2891 = scalar_lea.hbm %s4, %s2890
          %s2893 = sshll.u32 %s2870, 4
          %s2894 = int_to_ptr.vmem [resolvable:$true] %s2893
          %s2895 = sshll.u32 %s2891, 4
          %s2896 = int_to_ptr.hbm [resolvable:$true] %s2895
          %2898 = dma.vmem_to_hbm [thread:$0]  %s2894, 128, %s2896, %s2867
        $region44: #{tpu_custom_call.1} parent=31 // pred_fallthru
          _
      $region32: #{tpu_custom_call.1} parent=5 // pred_fallthru
        _
      %p2899 = scmp.le.s32.totalorder 2, %s20
      // Predicated region
      $region45: #{tpu_custom_call.1} parent=5 // pred_check
        %p2900 = pneg %p2899
      $region46: #{tpu_custom_call.1} parent=5 // pred_check_branch
        %2902 = sbr.rel (%p2900) target = $region48
      $region47: #{tpu_custom_call.1} parent=5 // pred_region
        %s2903 = ssub.s32 %s20, 2
        // Predicated region
        $region49: #{tpu_custom_call.1} parent=47 // pred_check
          %p2904 = pneg %p122
        $region50: #{tpu_custom_call.1} parent=47 // pred_check_branch
          %2906 = sbr.rel (%p2904) target = $region52
        $region51: #{tpu_custom_call.1} parent=47 // pred_region
          %s2907 = sand.u32 %s107, 1
          %s2908 = scalar_lea.sflag [#allocation4], %s2907
          %s2909 = sand.u32 %s107, 1
          %s2910 = smul.addr %s2909, 8
          %s2911 = scalar_lea.vmem [#allocation5], %s2910
          %2913 = dma.done %s2908, 128
        $region52: #{tpu_custom_call.1} parent=47 // pred_fallthru
          _
        // Predicated region
        $region53: #{tpu_custom_call.1} parent=47 // pred_check
          %p2914 = pneg %p148
        $region54: #{tpu_custom_call.1} parent=47 // pred_check_branch
          %2916 = sbr.rel (%p2914) target = $region56
        $region55: #{tpu_custom_call.1} parent=47 // pred_region
          %s2917 = sand.u32 %s133, 1
          %s2918 = scalar_lea.sflag [#allocation7], %s2917
          %s2919 = sand.u32 %s133, 1
          %s2920 = smul.addr %s2919, 8
          %s2921 = scalar_lea.vmem [#allocation6], %s2920
          %2923 = dma.done %s2918, 128
        $region56: #{tpu_custom_call.1} parent=47 // pred_fallthru
          _
      $region48: #{tpu_custom_call.1} parent=5 // pred_fallthru
        _
    $region6: #{tpu_custom_call.1} parent=1 // loop_footer
      %s24 = sadd.s32 1, %s20
    $region7: #{tpu_custom_call.1} parent=1 // loop_footer_branch
      %19 = sbr.rel target = $region3
    $region8: #{tpu_custom_call.1} parent=1 // loop_exit
      _
    %2924 = vsyncpa [#allocation3], 1
    %s2925 = scalar_lea.sflag [#allocation3], 1
    %2926 = vsyncpa %s2925, 1
    %2927 = vsyncpa [#allocation4], 1
    %s2928 = scalar_lea.sflag [#allocation4], 1
    %2929 = vsyncpa %s2928, 1
    %2930 = vsyncpa [#allocation7], 1
    %s2931 = scalar_lea.sflag [#allocation7], 1
    %2932 = vsyncpa %s2931, 1

</llo_original>
